<compile_context>
chip_gen: v6e
topology: v6e:2x2x1
jax: 0.10.0
libtpu: 0.0.40
codegen_flags: <defaults>
</compile_context>

<pallas_src>
import math
import functools

import jax
import jax.numpy as jnp
from jax.experimental import pallas as pl
from jax.experimental.pallas import tpu as pltpu

# torch.nn.RMSNorm(eps=None) uses torch.finfo(float32).eps
RMS_EPS = float(jnp.finfo(jnp.float32).eps)


def _round_up(v, m):
    return ((v + m - 1) // m) * m


def _rmsnorm(x, gamma, real_dim):
    # x: (T, Hpad) f32, gamma: (1, Hpad) f32. Padded columns of x are exactly 0,
    # so sum over the padded axis / real_dim == mean over the real hidden dim.
    ms = jnp.sum(x * x, axis=-1, keepdims=True) * (1.0 / real_dim)
    return x * jax.lax.rsqrt(ms + RMS_EPS) * gamma


def _gelu(x, approximate=False):
    if approximate:
        # tanh approximation: goes to the EUP slot (relieves VALU on v5e).
        c = math.sqrt(2.0 / math.pi)
        return 0.5 * x * (1.0 + jnp.tanh(c * (x + 0.044715 * x * x * x)))
    # nn.GELU() default: exact erf-based GELU (PyTorch parity).
    return 0.5 * x * (1.0 + jax.lax.erf(x * (1.0 / math.sqrt(2.0))))


# ----------------------------------------------------------------------------
# Kernel
# ----------------------------------------------------------------------------
def mlp_kernel(x_ref, w_in_ref, b_in_ref, g_in_ref,
               w_h_ref, b_h_ref, g_h_ref,
               w_out_ref, b_out_ref, o_ref,
               h_scr, res_scr, y_scr,
               *, real_hidden, has_hidden, hn_tile, n_chunks, approx_gelu):
    """Grid: (row_tiles, hidden_layer_steps, hidden_N_chunks).

    Axis 1 streams one hidden layer's weights per step; axis 2 streams N-chunks
    of that weight (only used when the full (H, H) block would not fit VMEM).
    h (bf16) / residual (f32) are carried in VMEM scratch across axes 1 and 2.
    Input layer runs at (l==0, n==0), output layer at the last (l, n)."""
    l = pl.program_id(1)
    n = pl.program_id(2)
    l_last = pl.num_programs(1) - 1
    n_last = pl.num_programs(2) - 1

    @pl.when((l == 0) & (n == 0))
    def _():
        # Input layer: bf16 matmul, f32 accumulation.
        h = jnp.dot(x_ref[...], w_in_ref[...], preferred_element_type=jnp.float32)
        h = h + b_in_ref[...]
        h = _gelu(_rmsnorm(h, g_in_ref[...], real_hidden), approx_gelu)
        h_scr[...] = h.astype(jnp.bfloat16)   # consumed only as bf16 MXU operand
        res_scr[...] = h                       # residual fixed at first activation (f32)

    if has_hidden:  # static: skipped entirely when there are no hidden layers
        if n_chunks == 1:
            # Whole hidden weight resident for this step: no y_scr round trip.
            y = jnp.dot(h_scr[...], w_h_ref[0],
                        preferred_element_type=jnp.float32) + b_h_ref[0]
            y = _gelu(_rmsnorm(y, g_h_ref[0], real_hidden), approx_gelu)
            h_scr[...] = (res_scr[...] + y).astype(jnp.bfloat16)
        else:
            # N-tiled streamed weight (v7x / large-H path): accumulate the
            # pre-norm activation chunk-by-chunk, finish at the last chunk.
            col0 = pl.multiple_of(n * hn_tile, 128)
            y_scr[:, pl.ds(col0, hn_tile)] = jnp.dot(
                h_scr[...], w_h_ref[0], preferred_element_type=jnp.float32)

            @pl.when(n == n_last)
            def _():
                y = y_scr[...] + b_h_ref[0]
                y = _gelu(_rmsnorm(y, g_h_ref[0], real_hidden), approx_gelu)
                h_scr[...] = (res_scr[...] + y).astype(jnp.bfloat16)

    @pl.when((l == l_last) & (n == n_last))
    def _():
        out = jnp.dot(h_scr[...], w_out_ref[...],
                      preferred_element_type=jnp.float32) + b_out_ref[...]
        o_ref[...] = out.astype(o_ref.dtype)


# ----------------------------------------------------------------------------
# Chip-aware tile / VMEM selection
# ----------------------------------------------------------------------------
def _chip_defaults():
    """Return (default_row_tile, vmem_capacity_bytes)."""
    vmem_cap = None
    try:
        vmem_cap = int(pltpu.get_tpu_info().vmem_capacity_bytes)
    except Exception:
        vmem_cap = None
    kind = ""
    try:
        kind = jax.devices()[0].device_kind.lower()
    except Exception:
        pass
    if "v7" in kind or "tpu7" in kind:
        row_tile, default_vmem = 512, 64 * 2**20     # crossover ~311 rows; 2 TCs
    elif "v6" in kind or "tpu6" in kind:
        row_tile, default_vmem = 1024, 128 * 2**20   # crossover ~680 rows
    else:                                            # v5e / unknown
        row_tile, default_vmem = 256, 128 * 2**20    # crossover ~240 rows
    if vmem_cap is None or vmem_cap <= 0:
        vmem_cap = default_vmem
    return row_tile, vmem_cap


def _vmem_budget(row_tile, hn_tile, in_p, h_p, out_p):
    bf16, f32 = 2, 4
    resident = (in_p * h_p + h_p * out_p) * bf16 + (4 * h_p + 2 * out_p) * f32
    streamed = 2 * (h_p * hn_tile * bf16 + 2 * h_p * f32)        # double-buffered w_h/b_h/g_h
    act = 2 * row_tile * in_p * bf16 + 2 * row_tile * out_p * f32  # x / out tiles
    scratch = row_tile * h_p * (bf16 + f32 + f32)                 # h(bf16), res(f32), y(f32)
    return resident + streamed + act + scratch


def _fit_tiles(row_tile, in_p, h_p, out_p, vmem_cap):
    """Shrink the streamed-weight N tile and/or row tile until the budget fits."""
    cap = int(vmem_cap * 0.80)
    cands = [h_p // k for k in range(1, h_p // 128 + 1)
             if h_p % k == 0 and (h_p // k) % 128 == 0]
    ci = 0
    hn = cands[ci]
    guard = 0
    while _vmem_budget(row_tile, hn, in_p, h_p, out_p) > cap and guard < 64:
        guard += 1
        if ci + 1 < len(cands) and hn > 512:
            ci += 1; hn = cands[ci]
        elif row_tile > 256:
            row_tile = max(256, row_tile - 128)
        elif ci + 1 < len(cands):
            ci += 1; hn = cands[ci]
        elif row_tile > 128:
            row_tile = max(128, row_tile - 64)
        elif row_tile > 8:
            row_tile = max(8, row_tile // 2)
        else:
            break
    return row_tile, hn


_BUFFERED1_OK = None


def _probe_buffered1():
    """One-time check that pipeline_mode=pl.Buffered(1) lowers on this jax/TPU."""
    global _BUFFERED1_OK
    if _BUFFERED1_OK is not None:
        return _BUFFERED1_OK
    try:
        spec = pl.BlockSpec((8, 128), lambda i: (0, 0), pipeline_mode=pl.Buffered(1))

        def _k(a_ref, o_ref):
            o_ref[...] = a_ref[...] * 2.0

        f = pl.pallas_call(
            _k,
            out_shape=jax.ShapeDtypeStruct((8, 128), jnp.float32),
            grid_spec=pltpu.PrefetchScalarGridSpec(
                num_scalar_prefetch=0, grid=(2,),
                in_specs=[spec],
                out_specs=pl.BlockSpec((8, 128), lambda i: (0, 0))),
        )
        jax.block_until_ready(f(jnp.ones((8, 128), jnp.float32)))
        _BUFFERED1_OK = True
    except Exception:
        _BUFFERED1_OK = False
    return _BUFFERED1_OK


# ----------------------------------------------------------------------------
# One-time parameter preparation (hoisted out of the per-call forward)
# ----------------------------------------------------------------------------
def prepare_params(params):
    """Pad feature dims to multiples of 128 and cast matmul operands to bf16,
    once (not per forward call)."""
    w_in, b_in, g_in, w_h, b_h, g_h, w_out, b_out = params
    in_size, hidden = w_in.shape
    out_size = w_out.shape[1]
    n_hidden = w_h.shape[0]

    in_p = _round_up(in_size, 128)
    h_p = _round_up(hidden, 128)
    out_p = _round_up(out_size, 128)

    w_in_p = jnp.pad(w_in, ((0, in_p - in_size), (0, h_p - hidden))).astype(jnp.bfloat16)
    b_in_p = jnp.pad(b_in, ((0, 0), (0, h_p - hidden))).astype(jnp.float32)
    g_in_p = jnp.pad(g_in, ((0, 0), (0, h_p - hidden))).astype(jnp.float32)

    if n_hidden > 0:
        w_h_p = jnp.pad(w_h, ((0, 0), (0, h_p - hidden), (0, h_p - hidden))).astype(jnp.bfloat16)
        b_h_p = jnp.pad(b_h, ((0, 0), (0, 0), (0, h_p - hidden))).astype(jnp.float32)
        g_h_p = jnp.pad(g_h, ((0, 0), (0, 0), (0, h_p - hidden))).astype(jnp.float32)
    else:
        # Tiny dummy arrays (unused in-kernel) so BlockSpec shapes stay valid.
        w_h_p = jnp.zeros((1, 8, 128), jnp.bfloat16)
        b_h_p = jnp.zeros((1, 1, 128), jnp.float32)
        g_h_p = jnp.zeros((1, 1, 128), jnp.float32)

    w_out_p = jnp.pad(w_out, ((0, h_p - hidden), (0, out_p - out_size))).astype(jnp.bfloat16)
    b_out_p = jnp.pad(b_out, ((0, 0), (0, out_p - out_size))).astype(jnp.float32)

    arrays = (w_in_p, b_in_p, g_in_p, w_h_p, b_h_p, g_h_p, w_out_p, b_out_p)
    meta = dict(in_size=in_size, hidden=hidden, out_size=out_size, n_hidden=n_hidden,
                in_p=in_p, h_p=h_p, out_p=out_p)
    return arrays, meta


# ----------------------------------------------------------------------------
# Forward
# ----------------------------------------------------------------------------
@functools.partial(jax.jit, static_argnames=(
    "in_size", "hidden", "out_size", "n_hidden",
    "row_tile", "hn_tile", "n_chunks", "vmem_limit", "use_buffered1", "approx_gelu"))
def _mlp_forward_padded(x, w_in_p, b_in_p, g_in_p, w_h_p, b_h_p, g_h_p,
                        w_out_p, b_out_p, *, in_size, hidden, out_size, n_hidden,
                        row_tile, hn_tile, n_chunks, vmem_limit, use_buffered1,
                        approx_gelu):
    B = x.shape[0]
    in_p, h_p = w_in_p.shape
    out_p = w_out_p.shape[1]
    b_p = _round_up(B, row_tile)

    # Per-call input prep only (weights were prepared once).
    xp = jnp.pad(x.astype(jnp.float32),
                 ((0, b_p - B), (0, in_p - in_size))).astype(jnp.bfloat16)

    has_hidden = n_hidden > 0
    n_layer_steps = max(n_hidden, 1)
    grid = (b_p // row_tile, n_layer_steps, n_chunks)

    def _res_spec(shape, index_map):
        # Resident (never-changing) blocks: single-buffer to save VMEM when supported.
        if use_buffered1:
            return pl.BlockSpec(shape, index_map, pipeline_mode=pl.Buffered(1))
        return pl.BlockSpec(shape, index_map)

    if has_hidden:
        w_h_spec = pl.BlockSpec((1, h_p, hn_tile), lambda i, l, n: (l, 0, n))
        b_h_spec = pl.BlockSpec((1, 1, h_p), lambda i, l, n: (l, 0, 0))
        g_h_spec = pl.BlockSpec((1, 1, h_p), lambda i, l, n: (l, 0, 0))
    else:
        w_h_spec = pl.BlockSpec((1, 8, 128), lambda i, l, n: (0, 0, 0))
        b_h_spec = pl.BlockSpec((1, 1, 128), lambda i, l, n: (0, 0, 0))
        g_h_spec = pl.BlockSpec((1, 1, 128), lambda i, l, n: (0, 0, 0))

    # y_scr only needed when the hidden weight is N-tiled.
    y_scr_shape = (row_tile, h_p) if (has_hidden and n_chunks > 1) else (8, 128)

    kernel = functools.partial(mlp_kernel, real_hidden=hidden, has_hidden=has_hidden,
                               hn_tile=hn_tile, n_chunks=n_chunks,
                               approx_gelu=approx_gelu)

    out = pl.pallas_call(
        kernel,
        out_shape=jax.ShapeDtypeStruct((b_p, out_p), jnp.float32),
        grid_spec=pltpu.PrefetchScalarGridSpec(
            num_scalar_prefetch=0,
            grid=grid,
            in_specs=[
                pl.BlockSpec((row_tile, in_p), lambda i, l, n: (i, 0)),  # x tile
                _res_spec((in_p, h_p), lambda i, l, n: (0, 0)),          # w_in (resident)
                _res_spec((1, h_p), lambda i, l, n: (0, 0)),             # b_in
                _res_spec((1, h_p), lambda i, l, n: (0, 0)),             # g_in
                w_h_spec,                                                # w_h (streamed L x N)
                b_h_spec,                                                # b_h (streamed L)
                g_h_spec,                                                # g_h (streamed L)
                _res_spec((h_p, out_p), lambda i, l, n: (0, 0)),         # w_out (resident)
                _res_spec((1, out_p), lambda i, l, n: (0, 0)),           # b_out
            ],
            out_specs=pl.BlockSpec((row_tile, out_p), lambda i, l, n: (i, 0)),
            scratch_shapes=[
                pltpu.VMEM((row_tile, h_p), jnp.bfloat16),  # h carry (bf16: halves vst bytes)
                pltpu.VMEM((row_tile, h_p), jnp.float32),   # residual (f32, exact)
                pltpu.VMEM(y_scr_shape, jnp.float32),       # pre-norm y for N-tiled path
            ],
        ),
        compiler_params=pltpu.CompilerParams(
            dimension_semantics=("parallel", "arbitrary", "arbitrary"),
            vmem_limit_bytes=vmem_limit,
        ),
    )(xp, w_in_p, b_in_p, g_in_p, w_h_p, b_h_p, g_h_p, w_out_p, b_out_p)

    return out[:B, :out_size]


def mlp_forward(x, prepared, *, row_tile=None, approx_gelu=False):
    """Non-jit wrapper: picks chip-aware static tiles / VMEM limit, then calls
    the jitted padded forward."""
    arrays, meta = prepared
    B = x.shape[0]
    in_p, h_p, out_p = meta["in_p"], meta["h_p"], meta["out_p"]

    default_rt, vmem_cap = _chip_defaults()
    rt = default_rt if row_tile is None else int(row_tile)
    rt = min(rt, max(128, _round_up(B, 128)))   # don't over-pad tiny batches
    rt = max(8, _round_up(rt, 8))
    rt, hn_tile = _fit_tiles(rt, in_p, h_p, out_p, vmem_cap)

    n_hidden = meta["n_hidden"]
    n_chunks = 1 if n_hidden == 0 else h_p // hn_tile
    budget = _vmem_budget(rt, hn_tile, in_p, h_p, out_p)
    vmem_limit = int(min(vmem_cap * 0.85, max(budget * 1.3, 32 * 2**20)))

    return _mlp_forward_padded(
        x, *arrays,
        in_size=meta["in_size"], hidden=meta["hidden"], out_size=meta["out_size"],
        n_hidden=n_hidden, row_tile=rt, hn_tile=hn_tile, n_chunks=n_chunks,
        vmem_limit=vmem_limit, use_buffered1=_probe_buffered1(),
        approx_gelu=approx_gelu)


# ----------------------------------------------------------------------------
# Params / reference
# ----------------------------------------------------------------------------
def init_params(key, layers_num, input_size, hidden_size, output_size):
    """Deterministic synthetic init (PyTorch-Linear-style uniform bounds)."""
    n_hidden = layers_num - 1
    keys = jax.random.split(key, 4 + 2 * max(n_hidden, 1))

    def linear(kw, kb, fan_in, fan_out):
        bound = 1.0 / math.sqrt(fan_in)
        w = jax.random.uniform(kw, (fan_in, fan_out), jnp.float32, -bound, bound)
        b = jax.random.uniform(kb, (1, fan_out), jnp.float32, -bound, bound)
        return w, b

    w_in, b_in = linear(keys[0], keys[1], input_size, hidden_size)
    g_in = jnp.ones((1, hidden_size), jnp.float32)

    w_hs, b_hs = [], []
    for l in range(n_hidden):
        w, b = linear(keys[2 + 2 * l], keys[3 + 2 * l], hidden_size, hidden_size)
        w_hs.append(w)
        b_hs.append(b)
    if n_hidden > 0:
        w_h = jnp.stack(w_hs, axis=0)
        b_h = jnp.stack(b_hs, axis=0)
    else:
        w_h = jnp.zeros((0, hidden_size, hidden_size), jnp.float32)
        b_h = jnp.zeros((0, 1, hidden_size), jnp.float32)
    g_h = jnp.ones((max(n_hidden, 0), 1, hidden_size), jnp.float32)

    w_out, b_out = linear(keys[-2], keys[-1], hidden_size, output_size)
    return (w_in, b_in, g_in, w_h, b_h, g_h, w_out, b_out)


def mlp_reference(x, params, use_bf16=False):
    """Plain-JAX reference mirroring the PyTorch forward."""
    w_in, b_in, g_in, w_h, b_h, g_h, w_out, b_out = params

    def mm(a, w):
        if use_bf16:
            return jnp.dot(a.astype(jnp.bfloat16), w.astype(jnp.bfloat16),
                           preferred_element_type=jnp.float32)
        return jnp.dot(a, w)

    x = x.astype(jnp.float32)
    hidden = w_in.shape[1]
    h = _gelu(_rmsnorm(mm(x, w_in) + b_in, g_in, hidden))
    residual = h
    for l in range(w_h.shape[0]):
        y = _gelu(_rmsnorm(mm(h, w_h[l]) + b_h[l], g_h[l], hidden))
        h = residual + y
    return mm(h, w_out) + b_out


if __name__ == "__main__":
    # Small shapes consistent with the module: MLP(layers_num=3, 16 -> 32 -> 8)
    layers_num, input_size, hidden_size, output_size = 3, 16, 32, 8
    batch = 16

    key = jax.random.PRNGKey(0)
    kx, kp = jax.random.split(key)
    x = jax.random.normal(kx, (batch, input_size), jnp.float32)
    params = init_params(kp, layers_num, input_size, hidden_size, output_size)

    prepared = prepare_params(params)       # one-time pad + bf16 cast of weights
    out = mlp_forward(x, prepared)          # chip-aware row_tile / VMEM limit
    out = jax.block_until_ready(out)
    assert out.shape == (batch, output_size)

    # Tight check vs a bf16-matmul reference (same quantization points).
    ref_bf16 = mlp_reference(x, params, use_bf16=True)
    assert jnp.allclose(out, ref_bf16, atol=3e-3, rtol=3e-3), "mismatch vs bf16 reference"
    # Looser check vs the full-f32 PyTorch-equivalent reference (bf16 MXU drift).
    ref_f32 = mlp_reference(x, params, use_bf16=False)
    assert jnp.allclose(out, ref_f32, atol=5e-2, rtol=5e-2), "mismatch vs f32 reference"

    print("KERNEL_OK")
</pallas_src>

<mosaic_0001>
module attributes {stable_mosaic.version = 11 : i64} {
  func.func @_k(%arg0: i32, %arg1: memref<8x128xf32, #tpu.memory_space<vmem>>, %arg2: memref<8x128xf32, #tpu.memory_space<vmem>>) attributes {dimension_semantics = [#tpu.dimension_semantics<arbitrary>], iteration_bounds = array<i64: 2>, scalar_prefetch = 0 : i64, scratch_operands = 0 : i64, tpu.core_type = #tpu.core_type<tc>, window_params = [{pipeline_mode = #tpu.pipeline_mode<synchronous>, transform_indices = @transform_0, window_bounds = array<i64: 8, 128>}, {pipeline_mode = #tpu.pipeline_mode<synchronous>, transform_indices = @transform_1, window_bounds = array<i64: 8, 128>}]} {
    %c0 = arith.constant 0 : index
    %c0_0 = arith.constant 0 : index
    %0 = vector.load %arg1[%c0, %c0_0] : memref<8x128xf32, #tpu.memory_space<vmem>>, vector<8x128xf32>
    %cst = arith.constant 2.000000e+00 : f32
    %1 = vector.broadcast %cst : f32 to vector<8x128xf32>
    %2 = arith.mulf %0, %1 : vector<8x128xf32>
    %c0_1 = arith.constant 0 : index
    %c0_2 = arith.constant 0 : index
    %3 = vector.load %arg2[%c0_1, %c0_2] : memref<8x128xf32, #tpu.memory_space<vmem>>, vector<8x128xf32>
    tpu.vector_store %arg2[%c0_1, %c0_2], %2 {strides = array<i32>} : memref<8x128xf32, #tpu.memory_space<vmem>>, vector<8x128xf32>,
    return
  }
  func.func @transform_0(%arg0: i32) -> (i32, i32) {
    %c0_i32 = arith.constant 0 : i32
    %c0_i32_0 = arith.constant 0 : i32
    %c0_i32_1 = arith.constant 0 : i32
    return %c0_i32, %c0_i32_0 : i32, i32
  }
  func.func @transform_1(%arg0: i32) -> (i32, i32) {
    %c0_i32 = arith.constant 0 : i32
    %c0_i32_0 = arith.constant 0 : i32
    %c0_i32_1 = arith.constant 0 : i32
    return %c0_i32, %c0_i32_0 : i32, i32
  }
}

module attributes {stable_mosaic.version = 11 : i64} {
  func.func @mlp_kernel(%arg0: i32, %arg1: i32, %arg2: i32, %arg3: memref<128x128xbf16, #tpu.memory_space<vmem>>, %arg4: memref<128x128xbf16, #tpu.memory_space<vmem>>, %arg5: memref<1x128xf32, #tpu.memory_space<vmem>>, %arg6: memref<1x128xf32, #tpu.memory_space<vmem>>, %arg7: memref<1x128x128xbf16, #tpu.memory_space<vmem>>, %arg8: memref<1x1x128xf32, #tpu.memory_space<vmem>>, %arg9: memref<1x1x128xf32, #tpu.memory_space<vmem>>, %arg10: memref<128x128xbf16, #tpu.memory_space<vmem>>, %arg11: memref<1x128xf32, #tpu.memory_space<vmem>>, %arg12: memref<128x128xf32, #tpu.memory_space<vmem>>, %arg13: memref<128x128xbf16, #tpu.memory_space<vmem>>, %arg14: memref<128x128xf32, #tpu.memory_space<vmem>>, %arg15: memref<8x128xf32, #tpu.memory_space<vmem>>) attributes {dimension_semantics = [#tpu.dimension_semantics<parallel>, #tpu.dimension_semantics<arbitrary>, #tpu.dimension_semantics<arbitrary>], iteration_bounds = array<i64: 1, 2, 1>, scalar_prefetch = 0 : i64, scratch_operands = 3 : i64, tpu.core_type = #tpu.core_type<tc>, window_params = [{transform_indices = @transform_0, window_bounds = array<i64: 128, 128>}, {pipeline_mode = #tpu.pipeline_mode<synchronous>, transform_indices = @transform_1, window_bounds = array<i64: 128, 128>}, {pipeline_mode = #tpu.pipeline_mode<synchronous>, transform_indices = @transform_2, window_bounds = array<i64: 1, 128>}, {pipeline_mode = #tpu.pipeline_mode<synchronous>, transform_indices = @transform_3, window_bounds = array<i64: 1, 128>}, {transform_indices = @transform_4, window_bounds = array<i64: 1, 128, 128>}, {transform_indices = @transform_5, window_bounds = array<i64: 1, 1, 128>}, {transform_indices = @transform_6, window_bounds = array<i64: 1, 1, 128>}, {pipeline_mode = #tpu.pipeline_mode<synchronous>, transform_indices = @transform_7, window_bounds = array<i64: 128, 128>}, {pipeline_mode = #tpu.pipeline_mode<synchronous>, transform_indices = @transform_8, window_bounds = array<i64: 1, 128>}, {transform_indices = @transform_9, window_bounds = array<i64: 128, 128>}]} {
    %c0_i32 = arith.constant 0 : i32
    %0 = arith.cmpi eq, %arg1, %c0_i32 : i32
    %c0_i32_0 = arith.constant 0 : i32
    %1 = arith.cmpi eq, %arg2, %c0_i32_0 : i32
    %2 = arith.andi %0, %1 : i1
    %3 = arith.extui %2 : i1 to i32
    %c0_i32_1 = arith.constant 0 : i32
    %4 = arith.cmpi ne, %3, %c0_i32_1 : i32
    scf.if %4 {
      %c0_24 = arith.constant 0 : index
      %c0_25 = arith.constant 0 : index
      %44 = vector.load %arg3[%c0_24, %c0_25] : memref<128x128xbf16, #tpu.memory_space<vmem>>, vector<128x128xbf16>
      %c0_26 = arith.constant 0 : index
      %c0_27 = arith.constant 0 : index
      %45 = vector.load %arg4[%c0_26, %c0_27] : memref<128x128xbf16, #tpu.memory_space<vmem>>, vector<128x128xbf16>
      %cst_28 = arith.constant dense<0.000000e+00> : vector<128x128xf32>
      %46 = tpu.matmul %44, %45, %cst_28 {dimension_numbers = #tpu.dot_dimension_numbers<[1], [0], [0], [1], [0, 0, 1, 1], [], []>} : vector<128x128xbf16>, vector<128x128xbf16>, vector<128x128xf32> -> vector<128x128xf32>
      %c0_29 = arith.constant 0 : index
      %c0_30 = arith.constant 0 : index
      %47 = vector.load %arg5[%c0_29, %c0_30] : memref<1x128xf32, #tpu.memory_space<vmem>>, vector<1x128xf32>
      %48 = vector.broadcast %47 : vector<1x128xf32> to vector<128x128xf32>
      %49 = arith.addf %46, %48 : vector<128x128xf32>
      %c0_31 = arith.constant 0 : index
      %c0_32 = arith.constant 0 : index
      %50 = vector.load %arg6[%c0_31, %c0_32] : memref<1x128xf32, #tpu.memory_space<vmem>>, vector<1x128xf32>
      %51 = arith.mulf %49, %49 : vector<128x128xf32>
      %cst_33 = arith.constant dense<0.000000e+00> : vector<128xf32>
      %52 = vector.multi_reduction <add>, %51, %cst_33 [1] : vector<128x128xf32> to vector<128xf32>
      %53 = vector.shape_cast %52 : vector<128xf32> to vector<128x1xf32>
      %cst_34 = arith.constant 3.125000e-02 : f32
      %54 = vector.broadcast %cst_34 : f32 to vector<128x1xf32>
      %55 = arith.mulf %53, %54 : vector<128x1xf32>
      %cst_35 = arith.constant 1.1920929E-7 : f32
      %56 = vector.broadcast %cst_35 : f32 to vector<128x1xf32>
      %57 = arith.addf %55, %56 : vector<128x1xf32>
      %58 = math.rsqrt %57 : vector<128x1xf32>
      %59 = vector.broadcast %58 : vector<128x1xf32> to vector<128x128xf32>
      %60 = arith.mulf %49, %59 : vector<128x128xf32>
      %61 = vector.broadcast %50 : vector<1x128xf32> to vector<128x128xf32>
      %62 = arith.mulf %60, %61 : vector<128x128xf32>
      %cst_36 = arith.constant 5.000000e-01 : f32
      %63 = vector.broadcast %cst_36 : f32 to vector<128x128xf32>
      %64 = arith.mulf %63, %62 : vector<128x128xf32>
      %cst_37 = arith.constant 0.707106769 : f32
      %65 = vector.broadcast %cst_37 : f32 to vector<128x128xf32>
      %66 = arith.mulf %62, %65 : vector<128x128xf32>
      %67 = math.erf %66 : vector<128x128xf32>
      %cst_38 = arith.constant 1.000000e+00 : f32
      %68 = vector.broadcast %cst_38 : f32 to vector<128x128xf32>
      %69 = arith.addf %68, %67 : vector<128x128xf32>
      %70 = arith.mulf %64, %69 : vector<128x128xf32>
      %71 = arith.truncf %70 : vector<128x128xf32> to vector<128x128xbf16>
      %c0_39 = arith.constant 0 : index
      %c0_40 = arith.constant 0 : index
      %72 = vector.load %arg13[%c0_39, %c0_40] : memref<128x128xbf16, #tpu.memory_space<vmem>>, vector<128x128xbf16>
      tpu.vector_store %arg13[%c0_39, %c0_40], %71 {strides = array<i32>} : memref<128x128xbf16, #tpu.memory_space<vmem>>, vector<128x128xbf16>,
      %c0_41 = arith.constant 0 : index
      %c0_42 = arith.constant 0 : index
      %73 = vector.load %arg14[%c0_41, %c0_42] : memref<128x128xf32, #tpu.memory_space<vmem>>, vector<128x128xf32>
      tpu.vector_store %arg14[%c0_41, %c0_42], %70 {strides = array<i32>} : memref<128x128xf32, #tpu.memory_space<vmem>>, vector<128x128xf32>,
    } else {
    }
    %c0 = arith.constant 0 : index
    %c0_2 = arith.constant 0 : index
    %5 = vector.load %arg13[%c0, %c0_2] : memref<128x128xbf16, #tpu.memory_space<vmem>>, vector<128x128xbf16>
    %c0_3 = arith.constant 0 : index
    %c0_4 = arith.constant 0 : index
    %c0_5 = arith.constant 0 : index
    %6 = vector.load %arg7[%c0_3, %c0_4, %c0_5] : memref<1x128x128xbf16, #tpu.memory_space<vmem>>, vector<1x128x128xbf16>
    %7 = vector.shape_cast %6 : vector<1x128x128xbf16> to vector<128x128xbf16>
    %cst = arith.constant dense<0.000000e+00> : vector<128x128xf32>
    %8 = tpu.matmul %5, %7, %cst {dimension_numbers = #tpu.dot_dimension_numbers<[1], [0], [0], [1], [0, 0, 1, 1], [], []>} : vector<128x128xbf16>, vector<128x128xbf16>, vector<128x128xf32> -> vector<128x128xf32>
    %c0_6 = arith.constant 0 : index
    %c0_7 = arith.constant 0 : index
    %c0_8 = arith.constant 0 : index
    %9 = vector.load %arg8[%c0_6, %c0_7, %c0_8] : memref<1x1x128xf32, #tpu.memory_space<vmem>>, vector<1x1x128xf32>
    %10 = vector.shape_cast %9 : vector<1x1x128xf32> to vector<1x128xf32>
    %11 = vector.broadcast %10 : vector<1x128xf32> to vector<128x128xf32>
    %12 = arith.addf %8, %11 : vector<128x128xf32>
    %c0_9 = arith.constant 0 : index
    %c0_10 = arith.constant 0 : index
    %c0_11 = arith.constant 0 : index
    %13 = vector.load %arg9[%c0_9, %c0_10, %c0_11] : memref<1x1x128xf32, #tpu.memory_space<vmem>>, vector<1x1x128xf32>
    %14 = vector.shape_cast %13 : vector<1x1x128xf32> to vector<1x128xf32>
    %15 = arith.mulf %12, %12 : vector<128x128xf32>
    %cst_12 = arith.constant dense<0.000000e+00> : vector<128xf32>
    %16 = vector.multi_reduction <add>, %15, %cst_12 [1] : vector<128x128xf32> to vector<128xf32>
    %17 = vector.shape_cast %16 : vector<128xf32> to vector<128x1xf32>
    %cst_13 = arith.constant 3.125000e-02 : f32
    %18 = vector.broadcast %cst_13 : f32 to vector<128x1xf32>
    %19 = arith.mulf %17, %18 : vector<128x1xf32>
    %cst_14 = arith.constant 1.1920929E-7 : f32
    %20 = vector.broadcast %cst_14 : f32 to vector<128x1xf32>
    %21 = arith.addf %19, %20 : vector<128x1xf32>
    %22 = math.rsqrt %21 : vector<128x1xf32>
    %23 = vector.broadcast %22 : vector<128x1xf32> to vector<128x128xf32>
    %24 = arith.mulf %12, %23 : vector<128x128xf32>
    %25 = vector.broadcast %14 : vector<1x128xf32> to vector<128x128xf32>
    %26 = arith.mulf %24, %25 : vector<128x128xf32>
    %cst_15 = arith.constant 5.000000e-01 : f32
    %27 = vector.broadcast %cst_15 : f32 to vector<128x128xf32>
    %28 = arith.mulf %27, %26 : vector<128x128xf32>
    %cst_16 = arith.constant 0.707106769 : f32
    %29 = vector.broadcast %cst_16 : f32 to vector<128x128xf32>
    %30 = arith.mulf %26, %29 : vector<128x128xf32>
    %31 = math.erf %30 : vector<128x128xf32>
    %cst_17 = arith.constant 1.000000e+00 : f32
    %32 = vector.broadcast %cst_17 : f32 to vector<128x128xf32>
    %33 = arith.addf %32, %31 : vector<128x128xf32>
    %34 = arith.mulf %28, %33 : vector<128x128xf32>
    %c0_18 = arith.constant 0 : index
    %c0_19 = arith.constant 0 : index
    %35 = vector.load %arg14[%c0_18, %c0_19] : memref<128x128xf32, #tpu.memory_space<vmem>>, vector<128x128xf32>
    %36 = arith.addf %35, %34 : vector<128x128xf32>
    %37 = arith.truncf %36 : vector<128x128xf32> to vector<128x128xbf16>
    %c0_20 = arith.constant 0 : index
    %c0_21 = arith.constant 0 : index
    %38 = vector.load %arg13[%c0_20, %c0_21] : memref<128x128xbf16, #tpu.memory_space<vmem>>, vector<128x128xbf16>
    tpu.vector_store %arg13[%c0_20, %c0_21], %37 {strides = array<i32>} : memref<128x128xbf16, #tpu.memory_space<vmem>>, vector<128x128xbf16>,
    %c1_i32 = arith.constant 1 : i32
    %39 = arith.cmpi eq, %arg1, %c1_i32 : i32
    %c0_i32_22 = arith.constant 0 : i32
    %40 = arith.cmpi eq, %arg2, %c0_i32_22 : i32
    %41 = arith.andi %39, %40 : i1
    %42 = arith.extui %41 : i1 to i32
    %c0_i32_23 = arith.constant 0 : i32
    %43 = arith.cmpi ne, %42, %c0_i32_23 : i32
    scf.if %43 {
      %c0_24 = arith.constant 0 : index
      %c0_25 = arith.constant 0 : index
      %44 = vector.load %arg13[%c0_24, %c0_25] : memref<128x128xbf16, #tpu.memory_space<vmem>>, vector<128x128xbf16>
      %c0_26 = arith.constant 0 : index
      %c0_27 = arith.constant 0 : index
      %45 = vector.load %arg10[%c0_26, %c0_27] : memref<128x128xbf16, #tpu.memory_space<vmem>>, vector<128x128xbf16>
      %cst_28 = arith.constant dense<0.000000e+00> : vector<128x128xf32>
      %46 = tpu.matmul %44, %45, %cst_28 {dimension_numbers = #tpu.dot_dimension_numbers<[1], [0], [0], [1], [0, 0, 1, 1], [], []>} : vector<128x128xbf16>, vector<128x128xbf16>, vector<128x128xf32> -> vector<128x128xf32>
      %c0_29 = arith.constant 0 : index
      %c0_30 = arith.constant 0 : index
      %47 = vector.load %arg11[%c0_29, %c0_30] : memref<1x128xf32, #tpu.memory_space<vmem>>, vector<1x128xf32>
      %48 = vector.broadcast %47 : vector<1x128xf32> to vector<128x128xf32>
      %49 = arith.addf %46, %48 : vector<128x128xf32>
      %c0_31 = arith.constant 0 : index
      %c0_32 = arith.constant 0 : index
      %50 = vector.load %arg12[%c0_31, %c0_32] : memref<128x128xf32, #tpu.memory_space<vmem>>, vector<128x128xf32>
      tpu.vector_store %arg12[%c0_31, %c0_32], %49 {strides = array<i32>} : memref<128x128xf32, #tpu.memory_space<vmem>>, vector<128x128xf32>,
    } else {
    }
    return
  }
  func.func @transform_0(%arg0: i32, %arg1: i32, %arg2: i32) -> (i32, i32) {
    %c0_i32 = arith.constant 0 : i32
    %c0_i32_0 = arith.constant 0 : i32
    return %arg0, %c0_i32 : i32, i32
  }
  func.func @transform_1(%arg0: i32, %arg1: i32, %arg2: i32) -> (i32, i32) {
    %c0_i32 = arith.constant 0 : i32
    %c0_i32_0 = arith.constant 0 : i32
    %c0_i32_1 = arith.constant 0 : i32
    return %c0_i32, %c0_i32_0 : i32, i32
  }
  func.func @transform_2(%arg0: i32, %arg1: i32, %arg2: i32) -> (i32, i32) {
    %c0_i32 = arith.constant 0 : i32
    %c0_i32_0 = arith.constant 0 : i32
    %c0_i32_1 = arith.constant 0 : i32
    return %c0_i32, %c0_i32_0 : i32, i32
  }
  func.func @transform_3(%arg0: i32, %arg1: i32, %arg2: i32) -> (i32, i32) {
    %c0_i32 = arith.constant 0 : i32
    %c0_i32_0 = arith.constant 0 : i32
    %c0_i32_1 = arith.constant 0 : i32
    return %c0_i32, %c0_i32_0 : i32, i32
  }
  func.func @transform_4(%arg0: i32, %arg1: i32, %arg2: i32) -> (i32, i32, i32) {
    %c0_i32 = arith.constant 0 : i32
    %c0_i32_0 = arith.constant 0 : i32
    return %arg1, %c0_i32, %arg2 : i32, i32, i32
  }
  func.func @transform_5(%arg0: i32, %arg1: i32, %arg2: i32) -> (i32, i32, i32) {
    %c0_i32 = arith.constant 0 : i32
    %c0_i32_0 = arith.constant 0 : i32
    %c0_i32_1 = arith.constant 0 : i32
    return %arg1, %c0_i32, %c0_i32_0 : i32, i32, i32
  }
  func.func @transform_6(%arg0: i32, %arg1: i32, %arg2: i32) -> (i32, i32, i32) {
    %c0_i32 = arith.constant 0 : i32
    %c0_i32_0 = arith.constant 0 : i32
    %c0_i32_1 = arith.constant 0 : i32
    return %arg1, %c0_i32, %c0_i32_0 : i32, i32, i32
  }
  func.func @transform_7(%arg0: i32, %arg1: i32, %arg2: i32) -> (i32, i32) {
    %c0_i32 = arith.constant 0 : i32
    %c0_i32_0 = arith.constant 0 : i32
    %c0_i32_1 = arith.constant 0 : i32
    return %c0_i32, %c0_i32_0 : i32, i32
  }
  func.func @transform_8(%arg0: i32, %arg1: i32, %arg2: i32) -> (i32, i32) {
    %c0_i32 = arith.constant 0 : i32
    %c0_i32_0 = arith.constant 0 : i32
    %c0_i32_1 = arith.constant 0 : i32
    return %c0_i32, %c0_i32_0 : i32, i32
  }
  func.func @transform_9(%arg0: i32, %arg1: i32, %arg2: i32) -> (i32, i32) {
    %c0_i32 = arith.constant 0 : i32
    %c0_i32_0 = arith.constant 0 : i32
    return %arg0, %c0_i32 : i32, i32
  }
}

</mosaic_0001>

<llo_original>
// kernel: tpu_custom_call.1
$region0: #{tpu_custom_call.1}
  #allocation0 [shape = 'u32[]', space=smem, size = 0x4, offset = 0x4, fixed_abs, tag = 'smem constant byte address 0x4 - core index']
  #allocation1 [shape = 'u32[144,128]{1,0:T(1,128)}', space=vmem, size = 0x12000, scoped, tag = 'internal scratch']
  %s0 = inlined_call_operand.hbm [shape: f32[8,128], index: 0, kind: input, shape index: {}]
  %s1 = inlined_call_operand.hbm [shape: f32[8,128], index: 1, kind: output, shape index: {}]
  %s2 = sld [smem:[#allocation0]]
  $region41: #{tpu_custom_call.1} parent=0
    _
  %s4 = ssub.s32 1, %s2
  %s5 = scalar_select 0, %s4, %s2
  $region1: #{tpu_custom_call.1} parent=0
    #allocation2 [shape = 'u8[4096]{0}', space=vmem, size = 0x1000, scoped, tag = 'input window, operand 0, single buffered']
    #allocation3 [shape = 's32[2]{0}', space=sflag, size = 0x8, scoped, tag = 'scoped memory for tpu_custom_call.1']
    #allocation4 [shape = 's32[2]{0}', space=sflag, size = 0x8, scoped, tag = 'scoped memory for tpu_custom_call.1']
    #allocation5 [shape = 'u8[4096]{0}', space=vmem, size = 0x1000, scoped, tag = 'output window, operand 0, single buffered']
    %6 = vsyncpa [#allocation3], 0
    %7 = vsyncpa [#allocation4], 0
    loop: start=0, step=1, limit=4
    $region2: #{tpu_custom_call.1} parent=1 // loop_pre_header
      _
    $region3: #{tpu_custom_call.1} parent=1 // loop_header
      %s9 = sphi 0, %s13
      %p10 = scmp.ge.s32.totalorder %s9, 4
      %s17 = sphi 0, %s17
      %s19 = sphi 0, %s17
      %s20 = sphi 0, %s19
      %s34 = sphi 0, %s20
      %s38 = sphi 0, %s38
      %s40 = sphi 0, %s38
      %s41 = sphi 0, %s40
      %s55 = sphi 0, %s41
    $region4: #{tpu_custom_call.1} parent=1 // loop_header_branch
      %12 = sbr.rel (%p10) target = $region8
    $region5: #{tpu_custom_call.1} parent=1 // loop_body
      %s14 = ssub.s32 %s9, 1
      %s15 = ssub.s32 %s9, 2
      %s16 = sadd.s32 %s9, 1
      %s18 = sadd.s32 %s17, 1
      %p21 = scmp.eq.s32.totalorder %s9, 1
      %p22 = scmp.ne.s32.totalorder %s17, %s19
      %p23 = scmp.eq.s32.totalorder %s9, 0
      %p24 = por %p22, %p23
      %p25 = scmp.ne.s32.totalorder %s17, %s19
      %p26 = scmp.eq.s32.totalorder %s14, 1
      %p27 = por %p25, %p26
      %p28 = scmp.ne.s32.totalorder %s19, %s20
      %p29 = scmp.eq.s32.totalorder %s14, 0
      %p30 = por %p28, %p29
      %p31 = scmp.ne.s32.totalorder %s19, %s20
      %p32 = scmp.eq.s32.totalorder %s15, 1
      %p33 = por %p31, %p32
      %p35 = scmp.ne.s32.totalorder %s20, %s34
      %p36 = scmp.eq.s32.totalorder %s15, 0
      %p37 = por %p35, %p36
      %s39 = sadd.s32 %s38, 1
      %p42 = scmp.eq.s32.totalorder %s9, 1
      %p43 = scmp.ne.s32.totalorder %s38, %s40
      %p44 = scmp.eq.s32.totalorder %s9, 0
      %p45 = por %p43, %p44
      %p46 = scmp.ne.s32.totalorder %s38, %s40
      %p47 = scmp.eq.s32.totalorder %s14, 1
      %p48 = por %p46, %p47
      %p49 = scmp.ne.s32.totalorder %s40, %s41
      %p50 = scmp.eq.s32.totalorder %s14, 0
      %p51 = por %p49, %p50
      %p52 = scmp.ne.s32.totalorder %s40, %s41
      %p53 = scmp.eq.s32.totalorder %s15, 1
      %p54 = por %p52, %p53
      %p56 = scmp.ne.s32.totalorder %s41, %s55
      %p57 = scmp.eq.s32.totalorder %s15, 0
      %p58 = por %p56, %p57
      %p59 = scmp.le.s32.totalorder 1, %s9
      %p60 = scmp.lt.s32.totalorder %s9, 3
      %p61 = pnand %p59, %p60
      %p62 = pneg %p61
      // Predicated region
      $region9: #{tpu_custom_call.1} parent=5 // pred_check
        _
      $region10: #{tpu_custom_call.1} parent=5 // pred_check_branch
        %64 = sbr.rel (%p61) target = $region12
      $region11: #{tpu_custom_call.1} parent=5 // pred_region
        %s65 = ssub.s32 %s9, 1
        // Predicated region
        $region13: #{tpu_custom_call.1} parent=11 // pred_check
          %p66 = pneg %p30
        $region14: #{tpu_custom_call.1} parent=11 // pred_check_branch
          %68 = sbr.rel (%p66) target = $region16
        $region15: #{tpu_custom_call.1} parent=11 // pred_region
          %s70 = ssub.s32 128, 128
          %71 = vsyncadd [#allocation3], %s70
          %s73 = sshll.u32 [#allocation2], 4
          %s74 = int_to_ptr.vmem [resolvable:$true] %s73
          %76 = dma.hbm_to_vmem [thread:$0]  %s0, 128, %s74, [#allocation3]
        $region16: #{tpu_custom_call.1} parent=11 // pred_fallthru
          _
      $region12: #{tpu_custom_call.1} parent=5 // pred_fallthru
        _
      %p77 = scmp.lt.s32.totalorder %s9, 2
      // Predicated region
      $region17: #{tpu_custom_call.1} parent=5 // pred_check
        %p78 = pneg %p77
      $region18: #{tpu_custom_call.1} parent=5 // pred_check_branch
        %80 = sbr.rel (%p78) target = $region20
      $region19: #{tpu_custom_call.1} parent=5 // pred_region
        _
      $region20: #{tpu_custom_call.1} parent=5 // pred_fallthru
        _
      %p81 = scmp.le.s32.totalorder 1, %s9
      %p82 = scmp.lt.s32.totalorder %s9, 3
      %p83 = pnand %p81, %p82
      %p84 = pneg %p83
      // Predicated region
      $region21: #{tpu_custom_call.1} parent=5 // pred_check
        _
      $region22: #{tpu_custom_call.1} parent=5 // pred_check_branch
        %86 = sbr.rel (%p83) target = $region24
      $region23: #{tpu_custom_call.1} parent=5 // pred_region
        %s87 = ssub.s32 %s9, 1
        // Predicated region
        $region25: #{tpu_custom_call.1} parent=23 // pred_check
          %p88 = pneg %p30
        $region26: #{tpu_custom_call.1} parent=23 // pred_check_branch
          %90 = sbr.rel (%p88) target = $region28
        $region27: #{tpu_custom_call.1} parent=23 // pred_region
          %91 = dma.done [#allocation3], 128
        $region28: #{tpu_custom_call.1} parent=23 // pred_fallthru
          _
        %p92 = pneg %p30
        %p93 = pneg %p27
        %p94 = pneg %p51
        %p95 = pneg %p48
        %v96 = vld [vmem:[#allocation2] sm:$0xff]
        %v97 = vmul.f32 %v96, 2.0
        %98 = vst [vmem:[#allocation5] sm:$0xff] %v97
        // Predicated region
        $region29: #{tpu_custom_call.1} parent=23 // pred_check
          %p99 = pneg %p48
        $region30: #{tpu_custom_call.1} parent=23 // pred_check_branch
          %101 = sbr.rel (%p99) target = $region32
        $region31: #{tpu_custom_call.1} parent=23 // pred_region
          %s103 = ssub.s32 128, 128
          %104 = vsyncadd [#allocation4], %s103
          %s106 = sshll.u32 [#allocation5], 4
          %s107 = int_to_ptr.vmem [resolvable:$true] %s106
          %109 = dma.vmem_to_hbm [thread:$0]  %s107, 128, %s1, [#allocation4]
        $region32: #{tpu_custom_call.1} parent=23 // pred_fallthru
          _
        // Predicated region
        $region33: #{tpu_custom_call.1} parent=23 // pred_check
          %p110 = pneg %p48
        $region34: #{tpu_custom_call.1} parent=23 // pred_check_branch
          %112 = sbr.rel (%p110) target = $region36
        $region35: #{tpu_custom_call.1} parent=23 // pred_region
          %113 = dma.done [#allocation4], 128
        $region36: #{tpu_custom_call.1} parent=23 // pred_fallthru
          _
      $region24: #{tpu_custom_call.1} parent=5 // pred_fallthru
        _
      %p114 = scmp.le.s32.totalorder 2, %s9
      // Predicated region
      $region37: #{tpu_custom_call.1} parent=5 // pred_check
        %p115 = pneg %p114
      $region38: #{tpu_custom_call.1} parent=5 // pred_check_branch
        %117 = sbr.rel (%p115) target = $region40
      $region39: #{tpu_custom_call.1} parent=5 // pred_region
        %s118 = ssub.s32 %s9, 2
      $region40: #{tpu_custom_call.1} parent=5 // pred_fallthru
        _
    $region6: #{tpu_custom_call.1} parent=1 // loop_footer
      %s13 = sadd.s32 1, %s9
    $region7: #{tpu_custom_call.1} parent=1 // loop_footer_branch
      %8 = sbr.rel target = $region3
    $region8: #{tpu_custom_call.1} parent=1 // loop_exit
      _
    %119 = vsyncpa [#allocation3], 1
    %s120 = scalar_lea.sflag [#allocation3], 1
    %121 = vsyncpa %s120, 1
    %122 = vsyncpa [#allocation4], 1
    %s123 = scalar_lea.sflag [#allocation4], 1
    %124 = vsyncpa %s123, 1

// kernel: _mlp_forward_padded.1
$region0: #{_mlp_forward_padded.1}
  #allocation0 [shape = 'u32[]', space=smem, size = 0x4, offset = 0x4, fixed_abs, tag = 'smem constant byte address 0x4 - core index']
  #allocation1 [shape = 'u32[144,128]{1,0:T(1,128)}', space=vmem, size = 0x12000, scoped, tag = 'internal scratch']
  #allocation2 [shape = 'bf16[128,128]{1,0:T(8,128)(2,1)}', space=vmem, size = 0x8000, scoped, tag = 'scratch operand']
  #allocation3 [shape = 'f32[128,128]{1,0:T(8,128)}', space=vmem, size = 0x10000, scoped, tag = 'scratch operand']
  #allocation4 [shape = 'f32[8,128]{1,0:T(8,128)}', space=vmem, size = 0x1000, scoped, tag = 'scratch operand']
  %s0 = inlined_call_operand.vmem [shape: bf16[128,128], index: 0, kind: input, shape index: {}]
  %s1 = inlined_call_operand.vmem [shape: bf16[128,128], index: 1, kind: input, shape index: {}]
  %s2 = inlined_call_operand.vmem [shape: f32[1,128], index: 2, kind: input, shape index: {}]
  %s3 = inlined_call_operand.vmem [shape: f32[1,128], index: 3, kind: input, shape index: {}]
  %s4 = inlined_call_operand.hbm [shape: bf16[2,128,128], index: 4, kind: input, shape index: {}]
  %s5 = inlined_call_operand.vmem [shape: f32[2,1,128], index: 5, kind: input, shape index: {}]
  %s6 = inlined_call_operand.vmem [shape: f32[2,1,128], index: 6, kind: input, shape index: {}]
  %s7 = inlined_call_operand.hbm [shape: bf16[128,128], index: 7, kind: input, shape index: {}]
  %s8 = inlined_call_operand.vmem [shape: f32[1,128], index: 8, kind: input, shape index: {}]
  %s9 = inlined_call_operand.vmem [shape: f32[128,128], index: 9, kind: output, shape index: {}]
  %s10 = sld [smem:[#allocation0]]
  $region85: #{_mlp_forward_padded.1} parent=0
    _
  %s12 = ssub.s32 1, %s10
  %s13 = scalar_select 0, %s12, %s10
  $region1: #{_mlp_forward_padded.1} parent=0
    #allocation5 [shape = 'u8[65536]{0}', space=vmem, size = 0x10000, scoped, tag = 'input window, operand 4']
    #allocation6 [shape = 's32[2]{0}', space=sflag, size = 0x8, scoped, tag = 'scoped memory for _mlp_forward_padded.1']
    #allocation7 [shape = 'u8[32768]{0}', space=vmem, size = 0x8000, scoped, tag = 'input window, operand 7, single buffered']
    #allocation8 [shape = 's32[1]{0}', space=sflag, size = 0x4, scoped, tag = 'scoped memory for _mlp_forward_padded.1']
    %14 = vsyncpa [#allocation6], 0
    %s15 = scalar_lea.sflag [#allocation6], 1
    %16 = vsyncpa %s15, 0
    %17 = vsyncpa [#allocation8], 0
    loop: start=0, step=1, limit=4
    $region2: #{_mlp_forward_padded.1} parent=1 // loop_pre_header
      _
    $region3: #{_mlp_forward_padded.1} parent=1 // loop_header
      %s19 = sphi 0, %s23
      %p20 = scmp.ge.s32.totalorder %s19, 4
      %s26 = sphi 0, %s45
      %s27 = sphi 0, %s41
      %s28 = sphi 0, %s37
      %s29 = sphi 0, %s26
      %s30 = sphi 0, %s27
      %s31 = sphi 0, %s28
      %s32 = sphi 0, %s29
      %s33 = sphi 0, %s30
      %s34 = sphi 0, %s31
      %s48 = sphi 0, %s50
      %s51 = sphi 0, %s48
      %s52 = sphi 0, %s51
      %s68 = sphi 0, %s52
      %s72 = sphi 0, %s72
      %s74 = sphi 0, %s72
      %s75 = sphi 0, %s74
      %s89 = sphi 0, %s75
      %s93 = sphi 0, %s93
      %s95 = sphi 0, %s93
      %s96 = sphi 0, %s95
      %s110 = sphi 0, %s96
      %s114 = sphi 0, %s114
      %s116 = sphi 0, %s114
      %s117 = sphi 0, %s116
      %s131 = sphi 0, %s117
      %s139 = sphi 0, %s141
      %s142 = sphi 0, %s139
      %s143 = sphi 0, %s142
      %s159 = sphi 0, %s143
      %s165 = sphi 0, %s167
      %s168 = sphi 0, %s165
      %s169 = sphi 0, %s168
      %s185 = sphi 0, %s169
      %s191 = sphi 0, %s193
      %s194 = sphi 0, %s191
      %s195 = sphi 0, %s194
      %s211 = sphi 0, %s195
      %s215 = sphi 0, %s215
      %s217 = sphi 0, %s215
      %s218 = sphi 0, %s217
      %s232 = sphi 0, %s218
      %s236 = sphi 0, %s236
      %s238 = sphi 0, %s236
      %s239 = sphi 0, %s238
      %s253 = sphi 0, %s239
      %s259 = sphi 0, %s261
      %s262 = sphi 0, %s259
      %s263 = sphi 0, %s262
      %s279 = sphi 0, %s263
    $region4: #{_mlp_forward_padded.1} parent=1 // loop_header_branch
      %22 = sbr.rel (%p20) target = $region8
    $region5: #{_mlp_forward_padded.1} parent=1 // loop_body
      %s24 = ssub.s32 %s19, 1
      %s25 = ssub.s32 %s19, 2
      %s35 = sadd.s32 1, %s28
      %p36 = scmp.ge.s32.totalorder %s35, 1
      %s37 = scalar_select %p36, 0, %s35
      %s38 = sadd.s32 1, %s27
      %s39 = scalar_select %p36, %s38, %s27
      %p40 = scmp.ge.s32.totalorder %s39, 2
      %s41 = scalar_select %p40, 0, %s39
      %s42 = sadd.s32 1, %s26
      %s43 = scalar_select %p40, %s42, %s26
      %p44 = scmp.ge.s32.totalorder %s43, 1
      %s45 = scalar_select %p44, 0, %s43
      %s46 = ssub.s32 %s26, %s45
      %p47 = scmp.eq.s32.totalorder %s46, 0
      %s49 = sadd.s32 %s48, 1
      %s50 = scalar_select %p47, %s48, %s49
      %p53 = pneg %p47
      %p54 = scmp.eq.s32.totalorder %s19, 1
      %p55 = por %p53, %p54
      %p56 = scmp.ne.s32.totalorder %s48, %s51
      %p57 = scmp.eq.s32.totalorder %s19, 0
      %p58 = por %p56, %p57
      %p59 = scmp.ne.s32.totalorder %s48, %s51
      %p60 = scmp.eq.s32.totalorder %s24, 1
      %p61 = por %p59, %p60
      %p62 = scmp.ne.s32.totalorder %s51, %s52
      %p63 = scmp.eq.s32.totalorder %s24, 0
      %p64 = por %p62, %p63
      %p65 = scmp.ne.s32.totalorder %s51, %s52
      %p66 = scmp.eq.s32.totalorder %s25, 1
      %p67 = por %p65, %p66
      %p69 = scmp.ne.s32.totalorder %s52, %s68
      %p70 = scmp.eq.s32.totalorder %s25, 0
      %p71 = por %p69, %p70
      %s73 = sadd.s32 %s72, 1
      %p76 = scmp.eq.s32.totalorder %s19, 1
      %p77 = scmp.ne.s32.totalorder %s72, %s74
      %p78 = scmp.eq.s32.totalorder %s19, 0
      %p79 = por %p77, %p78
      %p80 = scmp.ne.s32.totalorder %s72, %s74
      %p81 = scmp.eq.s32.totalorder %s24, 1
      %p82 = por %p80, %p81
      %p83 = scmp.ne.s32.totalorder %s74, %s75
      %p84 = scmp.eq.s32.totalorder %s24, 0
      %p85 = por %p83, %p84
      %p86 = scmp.ne.s32.totalorder %s74, %s75
      %p87 = scmp.eq.s32.totalorder %s25, 1
      %p88 = por %p86, %p87
      %p90 = scmp.ne.s32.totalorder %s75, %s89
      %p91 = scmp.eq.s32.totalorder %s25, 0
      %p92 = por %p90, %p91
      %s94 = sadd.s32 %s93, 1
      %p97 = scmp.eq.s32.totalorder %s19, 1
      %p98 = scmp.ne.s32.totalorder %s93, %s95
      %p99 = scmp.eq.s32.totalorder %s19, 0
      %p100 = por %p98, %p99
      %p101 = scmp.ne.s32.totalorder %s93, %s95
      %p102 = scmp.eq.s32.totalorder %s24, 1
      %p103 = por %p101, %p102
      %p104 = scmp.ne.s32.totalorder %s95, %s96
      %p105 = scmp.eq.s32.totalorder %s24, 0
      %p106 = por %p104, %p105
      %p107 = scmp.ne.s32.totalorder %s95, %s96
      %p108 = scmp.eq.s32.totalorder %s25, 1
      %p109 = por %p107, %p108
      %p111 = scmp.ne.s32.totalorder %s96, %s110
      %p112 = scmp.eq.s32.totalorder %s25, 0
      %p113 = por %p111, %p112
      %s115 = sadd.s32 %s114, 1
      %p118 = scmp.eq.s32.totalorder %s19, 1
      %p119 = scmp.ne.s32.totalorder %s114, %s116
      %p120 = scmp.eq.s32.totalorder %s19, 0
      %p121 = por %p119, %p120
      %p122 = scmp.ne.s32.totalorder %s114, %s116
      %p123 = scmp.eq.s32.totalorder %s24, 1
      %p124 = por %p122, %p123
      %p125 = scmp.ne.s32.totalorder %s116, %s117
      %p126 = scmp.eq.s32.totalorder %s24, 0
      %p127 = por %p125, %p126
      %p128 = scmp.ne.s32.totalorder %s116, %s117
      %p129 = scmp.eq.s32.totalorder %s25, 1
      %p130 = por %p128, %p129
      %p132 = scmp.ne.s32.totalorder %s117, %s131
      %p133 = scmp.eq.s32.totalorder %s25, 0
      %p134 = por %p132, %p133
      %s135 = ssub.s32 %s27, %s41
      %s136 = ssub.s32 %s28, %s37
      %s137 = sor.u32 %s135, %s136
      %p138 = scmp.eq.s32.totalorder %s137, 0
      %s140 = sadd.s32 %s139, 1
      %s141 = scalar_select %p138, %s139, %s140
      %p144 = pneg %p138
      %p145 = scmp.eq.s32.totalorder %s19, 1
      %p146 = por %p144, %p145
      %p147 = scmp.ne.s32.totalorder %s139, %s142
      %p148 = scmp.eq.s32.totalorder %s19, 0
      %p149 = por %p147, %p148
      %p150 = scmp.ne.s32.totalorder %s139, %s142
      %p151 = scmp.eq.s32.totalorder %s24, 1
      %p152 = por %p150, %p151
      %p153 = scmp.ne.s32.totalorder %s142, %s143
      %p154 = scmp.eq.s32.totalorder %s24, 0
      %p155 = por %p153, %p154
      %p156 = scmp.ne.s32.totalorder %s142, %s143
      %p157 = scmp.eq.s32.totalorder %s25, 1
      %p158 = por %p156, %p157
      %p160 = scmp.ne.s32.totalorder %s143, %s159
      %p161 = scmp.eq.s32.totalorder %s25, 0
      %p162 = por %p160, %p161
      %s163 = ssub.s32 %s27, %s41
      %p164 = scmp.eq.s32.totalorder %s163, 0
      %s166 = sadd.s32 %s165, 1
      %s167 = scalar_select %p164, %s165, %s166
      %p170 = pneg %p164
      %p171 = scmp.eq.s32.totalorder %s19, 1
      %p172 = por %p170, %p171
      %p173 = scmp.ne.s32.totalorder %s165, %s168
      %p174 = scmp.eq.s32.totalorder %s19, 0
      %p175 = por %p173, %p174
      %p176 = scmp.ne.s32.totalorder %s165, %s168
      %p177 = scmp.eq.s32.totalorder %s24, 1
      %p178 = por %p176, %p177
      %p179 = scmp.ne.s32.totalorder %s168, %s169
      %p180 = scmp.eq.s32.totalorder %s24, 0
      %p181 = por %p179, %p180
      %p182 = scmp.ne.s32.totalorder %s168, %s169
      %p183 = scmp.eq.s32.totalorder %s25, 1
      %p184 = por %p182, %p183
      %p186 = scmp.ne.s32.totalorder %s169, %s185
      %p187 = scmp.eq.s32.totalorder %s25, 0
      %p188 = por %p186, %p187
      %s189 = ssub.s32 %s27, %s41
      %p190 = scmp.eq.s32.totalorder %s189, 0
      %s192 = sadd.s32 %s191, 1
      %s193 = scalar_select %p190, %s191, %s192
      %p196 = pneg %p190
      %p197 = scmp.eq.s32.totalorder %s19, 1
      %p198 = por %p196, %p197
      %p199 = scmp.ne.s32.totalorder %s191, %s194
      %p200 = scmp.eq.s32.totalorder %s19, 0
      %p201 = por %p199, %p200
      %p202 = scmp.ne.s32.totalorder %s191, %s194
      %p203 = scmp.eq.s32.totalorder %s24, 1
      %p204 = por %p202, %p203
      %p205 = scmp.ne.s32.totalorder %s194, %s195
      %p206 = scmp.eq.s32.totalorder %s24, 0
      %p207 = por %p205, %p206
      %p208 = scmp.ne.s32.totalorder %s194, %s195
      %p209 = scmp.eq.s32.totalorder %s25, 1
      %p210 = por %p208, %p209
      %p212 = scmp.ne.s32.totalorder %s195, %s211
      %p213 = scmp.eq.s32.totalorder %s25, 0
      %p214 = por %p212, %p213
      %s216 = sadd.s32 %s215, 1
      %p219 = scmp.eq.s32.totalorder %s19, 1
      %p220 = scmp.ne.s32.totalorder %s215, %s217
      %p221 = scmp.eq.s32.totalorder %s19, 0
      %p222 = por %p220, %p221
      %p223 = scmp.ne.s32.totalorder %s215, %s217
      %p224 = scmp.eq.s32.totalorder %s24, 1
      %p225 = por %p223, %p224
      %p226 = scmp.ne.s32.totalorder %s217, %s218
      %p227 = scmp.eq.s32.totalorder %s24, 0
      %p228 = por %p226, %p227
      %p229 = scmp.ne.s32.totalorder %s217, %s218
      %p230 = scmp.eq.s32.totalorder %s25, 1
      %p231 = por %p229, %p230
      %p233 = scmp.ne.s32.totalorder %s218, %s232
      %p234 = scmp.eq.s32.totalorder %s25, 0
      %p235 = por %p233, %p234
      %s237 = sadd.s32 %s236, 1
      %p240 = scmp.eq.s32.totalorder %s19, 1
      %p241 = scmp.ne.s32.totalorder %s236, %s238
      %p242 = scmp.eq.s32.totalorder %s19, 0
      %p243 = por %p241, %p242
      %p244 = scmp.ne.s32.totalorder %s236, %s238
      %p245 = scmp.eq.s32.totalorder %s24, 1
      %p246 = por %p244, %p245
      %p247 = scmp.ne.s32.totalorder %s238, %s239
      %p248 = scmp.eq.s32.totalorder %s24, 0
      %p249 = por %p247, %p248
      %p250 = scmp.ne.s32.totalorder %s238, %s239
      %p251 = scmp.eq.s32.totalorder %s25, 1
      %p252 = por %p250, %p251
      %p254 = scmp.ne.s32.totalorder %s239, %s253
      %p255 = scmp.eq.s32.totalorder %s25, 0
      %p256 = por %p254, %p255
      %s257 = ssub.s32 %s26, %s45
      %p258 = scmp.eq.s32.totalorder %s257, 0
      %s260 = sadd.s32 %s259, 1
      %s261 = scalar_select %p258, %s259, %s260
      %p264 = pneg %p258
      %p265 = scmp.eq.s32.totalorder %s19, 1
      %p266 = por %p264, %p265
      %p267 = scmp.ne.s32.totalorder %s259, %s262
      %p268 = scmp.eq.s32.totalorder %s19, 0
      %p269 = por %p267, %p268
      %p270 = scmp.ne.s32.totalorder %s259, %s262
      %p271 = scmp.eq.s32.totalorder %s24, 1
      %p272 = por %p270, %p271
      %p273 = scmp.ne.s32.totalorder %s262, %s263
      %p274 = scmp.eq.s32.totalorder %s24, 0
      %p275 = por %p273, %p274
      %p276 = scmp.ne.s32.totalorder %s262, %s263
      %p277 = scmp.eq.s32.totalorder %s25, 1
      %p278 = por %p276, %p277
      %p280 = scmp.ne.s32.totalorder %s263, %s279
      %p281 = scmp.eq.s32.totalorder %s25, 0
      %p282 = por %p280, %p281
      %p283 = scmp.le.s32.totalorder 1, %s19
      %p284 = scmp.lt.s32.totalorder %s19, 3
      %p285 = pnand %p283, %p284
      %p286 = pneg %p285
      // Predicated region
      $region9: #{_mlp_forward_padded.1} parent=5 // pred_check
        _
      $region10: #{_mlp_forward_padded.1} parent=5 // pred_check_branch
        %288 = sbr.rel (%p285) target = $region12
      $region11: #{_mlp_forward_padded.1} parent=5 // pred_region
        %s289 = ssub.s32 %s19, 1
        // Predicated region
        $region13: #{_mlp_forward_padded.1} parent=11 // pred_check
          %p290 = pneg %p64
        $region14: #{_mlp_forward_padded.1} parent=11 // pred_check_branch
          %292 = sbr.rel (%p290) target = $region16
        $region15: #{_mlp_forward_padded.1} parent=11 // pred_region
          %s293 = smul.u32 16, %s29
          %p294 = scmp.lt.s32.totalorder %s293, 15
          %s295 = scalar_select %p294, %s293, 15
          %s296 = smul.addr %s295, 4
          %s297 = scalar_lea.vmem %s0, %s296
          %s298 = smul.u32 16, %s29
        $region16: #{_mlp_forward_padded.1} parent=11 // pred_fallthru
          _
        // Predicated region
        $region17: #{_mlp_forward_padded.1} parent=11 // pred_check
          %p299 = pneg %p85
        $region18: #{_mlp_forward_padded.1} parent=11 // pred_check_branch
          %301 = sbr.rel (%p299) target = $region20
        $region19: #{_mlp_forward_padded.1} parent=11 // pred_region
          _
        $region20: #{_mlp_forward_padded.1} parent=11 // pred_fallthru
          _
        // Predicated region
        $region21: #{_mlp_forward_padded.1} parent=11 // pred_check
          %p302 = pneg %p106
        $region22: #{_mlp_forward_padded.1} parent=11 // pred_check_branch
          %304 = sbr.rel (%p302) target = $region24
        $region23: #{_mlp_forward_padded.1} parent=11 // pred_region
          _
        $region24: #{_mlp_forward_padded.1} parent=11 // pred_fallthru
          _
        // Predicated region
        $region25: #{_mlp_forward_padded.1} parent=11 // pred_check
          %p305 = pneg %p127
        $region26: #{_mlp_forward_padded.1} parent=11 // pred_check_branch
          %307 = sbr.rel (%p305) target = $region28
        $region27: #{_mlp_forward_padded.1} parent=11 // pred_region
          _
        $region28: #{_mlp_forward_padded.1} parent=11 // pred_fallthru
          _
        // Predicated region
        $region29: #{_mlp_forward_padded.1} parent=11 // pred_check
          %p308 = pneg %p228
        $region30: #{_mlp_forward_padded.1} parent=11 // pred_check_branch
          %310 = sbr.rel (%p308) target = $region32
        $region31: #{_mlp_forward_padded.1} parent=11 // pred_region
          %s312 = ssub.s32 1024, 1024
          %313 = vsyncadd [#allocation8], %s312
          %s314 = sshll.u32 [#allocation7], 4
          %s315 = int_to_ptr.vmem [resolvable:$true] %s314
          %320 = dma.hbm_to_vmem [thread:$0]  %s7, 1024, %s315, [#allocation8], 64, 64, 4
        $region32: #{_mlp_forward_padded.1} parent=11 // pred_fallthru
          _
        // Predicated region
        $region33: #{_mlp_forward_padded.1} parent=11 // pred_check
          %p321 = pneg %p249
        $region34: #{_mlp_forward_padded.1} parent=11 // pred_check_branch
          %323 = sbr.rel (%p321) target = $region36
        $region35: #{_mlp_forward_padded.1} parent=11 // pred_region
          _
        $region36: #{_mlp_forward_padded.1} parent=11 // pred_fallthru
          _
      $region12: #{_mlp_forward_padded.1} parent=5 // pred_fallthru
        _
      %p324 = scmp.lt.s32.totalorder %s19, 2
      // Predicated region
      $region37: #{_mlp_forward_padded.1} parent=5 // pred_check
        %p325 = pneg %p324
      $region38: #{_mlp_forward_padded.1} parent=5 // pred_check_branch
        %327 = sbr.rel (%p325) target = $region40
      $region39: #{_mlp_forward_padded.1} parent=5 // pred_region
        // Predicated region
        $region41: #{_mlp_forward_padded.1} parent=39 // pred_check
          %p328 = pneg %p149
        $region42: #{_mlp_forward_padded.1} parent=39 // pred_check_branch
          %330 = sbr.rel (%p328) target = $region44
        $region43: #{_mlp_forward_padded.1} parent=39 // pred_region
          %s331 = sand.u32 %s139, 1
          %s332 = scalar_lea.sflag [#allocation6], %s331
          %s333 = sand.u32 %s139, 1
          %s334 = smul.addr %s333, 64
          %s335 = scalar_lea.vmem [#allocation5], %s334
          %s337 = ssub.s32 1024, 1024
          %338 = vsyncadd %s332, %s337
          %s339 = smul.addr %s27, 16
          %s340 = sadd.s32 %s28, %s339
          %s341 = smul.addr %s340, 64
          %s342 = scalar_lea.hbm %s4, %s341
          %s343 = sshll.u32 %s335, 4
          %s344 = int_to_ptr.vmem [resolvable:$true] %s343
          %349 = dma.hbm_to_vmem [thread:$0]  %s342, 1024, %s344, %s332, 64, 64, 4
        $region44: #{_mlp_forward_padded.1} parent=39 // pred_fallthru
          _
        // Predicated region
        $region45: #{_mlp_forward_padded.1} parent=39 // pred_check
          %p350 = pneg %p175
        $region46: #{_mlp_forward_padded.1} parent=39 // pred_check_branch
          %352 = sbr.rel (%p350) target = $region48
        $region47: #{_mlp_forward_padded.1} parent=39 // pred_region
          %p353 = scmp.lt.s32.totalorder %s27, 1
          %s354 = scalar_select %p353, %s27, 1
          %s355 = scalar_lea.vmem %s5, %s354
        $region48: #{_mlp_forward_padded.1} parent=39 // pred_fallthru
          _
        // Predicated region
        $region49: #{_mlp_forward_padded.1} parent=39 // pred_check
          %p356 = pneg %p201
        $region50: #{_mlp_forward_padded.1} parent=39 // pred_check_branch
          %358 = sbr.rel (%p356) target = $region52
        $region51: #{_mlp_forward_padded.1} parent=39 // pred_region
          %p359 = scmp.lt.s32.totalorder %s27, 1
          %s360 = scalar_select %p359, %s27, 1
          %s361 = scalar_lea.vmem %s6, %s360
        $region52: #{_mlp_forward_padded.1} parent=39 // pred_fallthru
          _
      $region40: #{_mlp_forward_padded.1} parent=5 // pred_fallthru
        _
      %p362 = scmp.le.s32.totalorder 1, %s19
      %p363 = scmp.lt.s32.totalorder %s19, 3
      %p364 = pnand %p362, %p363
      %p365 = pneg %p364
      // Predicated region
      $region53: #{_mlp_forward_padded.1} parent=5 // pred_check
        _
      $region54: #{_mlp_forward_padded.1} parent=5 // pred_check_branch
        %367 = sbr.rel (%p364) target = $region56
      $region55: #{_mlp_forward_padded.1} parent=5 // pred_region
        %s368 = ssub.s32 %s19, 1
        %s369 = sand.u32 %s142, 1
        %s370 = scalar_lea.sflag [#allocation6], %s369
        %s371 = sand.u32 %s142, 1
        %s372 = smul.addr %s371, 64
        %s373 = scalar_lea.vmem [#allocation5], %s372
        // Predicated region
        $region57: #{_mlp_forward_padded.1} parent=55 // pred_check
          %p374 = pneg %p155
        $region58: #{_mlp_forward_padded.1} parent=55 // pred_check_branch
          %376 = sbr.rel (%p374) target = $region60
        $region59: #{_mlp_forward_padded.1} parent=55 // pred_region
          %377 = dma.done %s370, 1024
        $region60: #{_mlp_forward_padded.1} parent=55 // pred_fallthru
          _
        // Predicated region
        $region61: #{_mlp_forward_padded.1} parent=55 // pred_check
          %p378 = pneg %p228
        $region62: #{_mlp_forward_padded.1} parent=55 // pred_check_branch
          %380 = sbr.rel (%p378) target = $region64
        $region63: #{_mlp_forward_padded.1} parent=55 // pred_region
          %381 = dma.done [#allocation8], 1024
        $region64: #{_mlp_forward_padded.1} parent=55 // pred_fallthru
          _
        %s382 = smul.u32 16, %s29
        %p383 = scmp.lt.s32.totalorder %s382, 15
        %s384 = scalar_select %p383, %s382, 15
        %s385 = smul.addr %s384, 4
        %s386 = scalar_lea.vmem %s0, %s385
        %p387 = pneg %p64
        %p388 = pneg %p61
        %p389 = pneg %p85
        %p390 = pneg %p82
        %p391 = pneg %p106
        %p392 = pneg %p103
        %p393 = pneg %p127
        %p394 = pneg %p124
        %s395 = sand.u32 %s142, 1
        %s396 = scalar_lea.sflag [#allocation6], %s395
        %s397 = sand.u32 %s142, 1
        %s398 = smul.addr %s397, 64
        %s399 = scalar_lea.vmem [#allocation5], %s398
        %p400 = pneg %p155
        %p401 = pneg %p152
        %p402 = scmp.lt.s32.totalorder %s30, 1
        %s403 = scalar_select %p402, %s30, 1
        %s404 = scalar_lea.vmem %s5, %s403
        %p405 = pneg %p181
        %p406 = pneg %p178
        %p407 = scmp.lt.s32.totalorder %s30, 1
        %s408 = scalar_select %p407, %s30, 1
        %s409 = scalar_lea.vmem %s6, %s408
        %p410 = pneg %p207
        %p411 = pneg %p204
        %p412 = pneg %p228
        %p413 = pneg %p225
        %p414 = pneg %p249
        %p415 = pneg %p246
        %p416 = pneg %p275
        %p417 = pneg %p272
        %s418 = smul.u32 16, %s29
        %p419 = scmp.lt.s32.totalorder %s418, 15
        %s420 = scalar_select %p419, %s418, 15
        %s421 = smul.addr %s420, 8
        %s422 = scalar_lea.vmem %s9, %s421
        %s423 = smul.u32 16, %s29
        %p424 = scmp.lt.s32.totalorder %s423, 15
        %s425 = scalar_select %p424, %s423, 15
        %s426 = smul.addr %s425, 4
        %s427 = scalar_lea.vmem %s0, %s426
        %s428 = smul.u32 16, %s29
        %p429 = scmp.lt.s32.totalorder %s30, 1
        %s430 = scalar_select %p429, %s30, 1
        %s431 = scalar_lea.vmem %s5, %s430
        %p432 = scmp.lt.s32.totalorder %s30, 1
        %s433 = scalar_select %p432, %s30, 1
        %s434 = scalar_lea.vmem %s6, %s433
        %s435 = smul.u32 16, %s29
        %p436 = scmp.lt.s32.totalorder %s435, 15
        %s437 = scalar_select %p436, %s435, 15
        %s438 = smul.addr %s437, 8
        %s439 = scalar_lea.vmem %s9, %s438
        %s440 = smul.u32 16, %s29
        %p442 = scmp.eq.s32.totalorder %s30, 0
        %p443 = scmp.eq.s32.totalorder %s31, 0
        %p444 = pnand %p442, %p443
        %p445 = pneg %p444
        // Predicated region
        $region65: #{_mlp_forward_padded.1} parent=55 // pred_check
          _
        $region66: #{_mlp_forward_padded.1} parent=55 // pred_check_branch
          %447 = sbr.rel (%p444) target = $region68
        $region67: #{_mlp_forward_padded.1} parent=55 // pred_region
          %v448 = vld [vmem:[%s427] sm:$0xf]
          %v449 = vld [vmem:[%s427 + $0x4] sm:$0xf]
          %v450 = vld [vmem:[%s427 + $0x8] sm:$0xf]
          %v451 = vld [vmem:[%s427 + $0xc] sm:$0xf]
          %v452 = vld [vmem:[%s427 + $0x10] sm:$0xf]
          %v453 = vld [vmem:[%s427 + $0x14] sm:$0xf]
          %v454 = vld [vmem:[%s427 + $0x18] sm:$0xf]
          %v455 = vld [vmem:[%s427 + $0x1c] sm:$0xf]
          %v456 = vld [vmem:[%s427 + $0x20] sm:$0xf]
          %v457 = vld [vmem:[%s427 + $0x24] sm:$0xf]
          %v458 = vld [vmem:[%s427 + $0x28] sm:$0xf]
          %v459 = vld [vmem:[%s427 + $0x2c] sm:$0xf]
          %v460 = vld [vmem:[%s427 + $0x30] sm:$0xf]
          %v461 = vld [vmem:[%s427 + $0x34] sm:$0xf]
          %v462 = vld [vmem:[%s427 + $0x38] sm:$0xf]
          %v463 = vld [vmem:[%s427 + $0x3c] sm:$0xf]
          %v464 = vld [vmem:[%s1] sm:$0xf]
          %v465 = vld [vmem:[%s1 + $0x4] sm:$0xf]
          %v466 = vld [vmem:[%s1 + $0x8] sm:$0xf]
          %v467 = vld [vmem:[%s1 + $0xc] sm:$0xf]
          %v468 = vld [vmem:[%s1 + $0x10] sm:$0xf]
          %v469 = vld [vmem:[%s1 + $0x14] sm:$0xf]
          %v470 = vld [vmem:[%s1 + $0x18] sm:$0xf]
          %v471 = vld [vmem:[%s1 + $0x1c] sm:$0xf]
          %v472 = vld [vmem:[%s1 + $0x20] sm:$0xf]
          %v473 = vld [vmem:[%s1 + $0x24] sm:$0xf]
          %v474 = vld [vmem:[%s1 + $0x28] sm:$0xf]
          %v475 = vld [vmem:[%s1 + $0x2c] sm:$0xf]
          %v476 = vld [vmem:[%s1 + $0x30] sm:$0xf]
          %v477 = vld [vmem:[%s1 + $0x34] sm:$0xf]
          %v478 = vld [vmem:[%s1 + $0x38] sm:$0xf]
          %v479 = vld [vmem:[%s1 + $0x3c] sm:$0xf]
          %v480 = vld [vmem:[%s2] sm:$0x1]
          %v482 = vlaneseq
          %v483 = vshrl.u32 %v482, 7
          %v484 = vsub.s32 0, %v483
          %v485 = vrot.slane %v480, %v484
          %v503 = vunpack.c.l.b16 %v448
          %v504 = vunpack.c.l.b16 %v449
          %v505 = vunpack.c.l.b16 %v450
          %v506 = vunpack.c.l.b16 %v451
          %v507 = vunpack.c.l.b16 %v452
          %v508 = vunpack.c.l.b16 %v453
          %v509 = vunpack.c.l.b16 %v454
          %v510 = vunpack.c.l.b16 %v455
          %v511 = vunpack.c.l.b16 %v456
          %v512 = vunpack.c.l.b16 %v457
          %v513 = vunpack.c.l.b16 %v458
          %v514 = vunpack.c.l.b16 %v459
          %v515 = vunpack.c.l.b16 %v460
          %v516 = vunpack.c.l.b16 %v461
          %v517 = vunpack.c.l.b16 %v462
          %v518 = vunpack.c.l.b16 %v463
          %v519 = vpack.c.b16 %v504, %v503
          %v520 = vpack.c.b16 %v506, %v505
          %v521 = vpack.c.b16 %v508, %v507
          %v522 = vpack.c.b16 %v510, %v509
          %v523 = vpack.c.b16 %v512, %v511
          %v524 = vpack.c.b16 %v514, %v513
          %v525 = vpack.c.b16 %v516, %v515
          %v526 = vpack.c.b16 %v518, %v517
          %v551 = vunpack.c.l.b16 %v464
          %v552 = vunpack.c.l.b16 %v465
          %v553 = vunpack.c.l.b16 %v466
          %v554 = vunpack.c.l.b16 %v467
          %v555 = vunpack.c.l.b16 %v468
          %v556 = vunpack.c.l.b16 %v469
          %v557 = vunpack.c.l.b16 %v470
          %v558 = vunpack.c.l.b16 %v471
          %v559 = vunpack.c.l.b16 %v472
          %v560 = vunpack.c.l.b16 %v473
          %v561 = vunpack.c.l.b16 %v474
          %v562 = vunpack.c.l.b16 %v475
          %v563 = vunpack.c.l.b16 %v476
          %v564 = vunpack.c.l.b16 %v477
          %v565 = vunpack.c.l.b16 %v478
          %v566 = vunpack.c.l.b16 %v479
          %v567 = vpack.c.b16 %v552, %v551
          %v568 = vpack.c.b16 %v554, %v553
          %v569 = vpack.c.b16 %v556, %v555
          %v570 = vpack.c.b16 %v558, %v557
          %v571 = vpack.c.b16 %v560, %v559
          %v572 = vpack.c.b16 %v562, %v561
          %v573 = vpack.c.b16 %v564, %v563
          %v574 = vpack.c.b16 %v566, %v565
          %583 = vmatprep.subr.bf16.mxu0 0
          %584 = vmatpush1.bf16.msra.mxu0 %v574
          %585 = vmatprep.subr.bf16.mxu0 0
          %586 = vmatpush1.bf16.msra.mxu0 %v573
          %587 = vmatprep.subr.bf16.mxu0 0
          %588 = vmatpush1.bf16.msra.mxu0 %v572
          %589 = vmatprep.subr.bf16.mxu0 0
          %590 = vmatpush1.bf16.msra.mxu0 %v571
          %591 = vmatprep.subr.bf16.mxu0 0
          %592 = vmatpush1.bf16.msra.mxu0 %v570
          %593 = vmatprep.subr.bf16.mxu0 0
          %594 = vmatpush1.bf16.msra.mxu0 %v569
          %595 = vmatprep.subr.bf16.mxu0 0
          %596 = vmatpush1.bf16.msra.mxu0 %v568
          %597 = vmatprep.subr.bf16.mxu0 0
          %598 = vmatpush1.bf16.msra.mxu0 %v567
          %599 = vmatprep.subr.bf16.mxu0 0
          %600 = vmatpush2.bf16.msra.mxu0 0
          %601 = vmatprep.subr.bf16.mxu0 0
          %602 = vmatpush2.bf16.msra.mxu0 0
          %603 = vmatprep.subr.bf16.mxu0 0
          %604 = vmatpush2.bf16.msra.mxu0 0
          %605 = vmatprep.subr.bf16.mxu0 0
          %606 = vmatpush2.bf16.msra.mxu0 0
          %607 = vmatprep.subr.bf16.mxu0 0
          %608 = vmatpush2.bf16.msra.mxu0 0
          %609 = vmatprep.subr.bf16.mxu0 0
          %610 = vmatpush2.bf16.msra.mxu0 0
          %611 = vmatprep.subr.bf16.mxu0 0
          %612 = vmatpush2.bf16.msra.mxu0 0
          %613 = vmatprep.subr.bf16.mxu0 0
          %614 = vmatpush2.bf16.msra.mxu0 0
          %615 = vmatprep.mubr.bf16.mxu0 0
          %616 = vmatmul.mubr.bf16.gmra.mxu0 %v519
          %v617 = vpop.f32.mrf.mxu0
          %v618 = vadd.f32 %v485, %v617
          %v619 = vpop.f32.mrf.mxu0
          %v620 = vpop.f32.mrf.mxu0
          %v621 = vadd.f32 %v485, %v620
          %v622 = vpop.f32.mrf.mxu0
          %623 = vmatprep.mubr.bf16.mxu0 0
          %624 = vmatmul.mubr.bf16.gmra.mxu0 %v520
          %v625 = vpop.f32.mrf.mxu0
          %v626 = vadd.f32 %v485, %v625
          %v627 = vpop.f32.mrf.mxu0
          %v628 = vpop.f32.mrf.mxu0
          %v629 = vadd.f32 %v485, %v628
          %v630 = vpop.f32.mrf.mxu0
          %631 = vmatprep.mubr.bf16.mxu0 0
          %632 = vmatmul.mubr.bf16.gmra.mxu0 %v521
          %v633 = vpop.f32.mrf.mxu0
          %v634 = vadd.f32 %v485, %v633
          %v635 = vpop.f32.mrf.mxu0
          %v636 = vpop.f32.mrf.mxu0
          %v637 = vadd.f32 %v485, %v636
          %v638 = vpop.f32.mrf.mxu0
          %639 = vmatprep.mubr.bf16.mxu0 0
          %640 = vmatmul.mubr.bf16.gmra.mxu0 %v522
          %v641 = vpop.f32.mrf.mxu0
          %v642 = vadd.f32 %v485, %v641
          %v643 = vpop.f32.mrf.mxu0
          %v644 = vpop.f32.mrf.mxu0
          %v645 = vadd.f32 %v485, %v644
          %v646 = vpop.f32.mrf.mxu0
          %647 = vmatprep.mubr.bf16.mxu0 0
          %648 = vmatmul.mubr.bf16.gmra.mxu0 %v523
          %v649 = vpop.f32.mrf.mxu0
          %v650 = vadd.f32 %v485, %v649
          %v651 = vpop.f32.mrf.mxu0
          %v652 = vpop.f32.mrf.mxu0
          %v653 = vadd.f32 %v485, %v652
          %v654 = vpop.f32.mrf.mxu0
          %655 = vmatprep.mubr.bf16.mxu0 0
          %656 = vmatmul.mubr.bf16.gmra.mxu0 %v524
          %v657 = vpop.f32.mrf.mxu0
          %v658 = vadd.f32 %v485, %v657
          %v659 = vpop.f32.mrf.mxu0
          %v660 = vpop.f32.mrf.mxu0
          %v661 = vadd.f32 %v485, %v660
          %v662 = vpop.f32.mrf.mxu0
          %663 = vmatprep.mubr.bf16.mxu0 0
          %664 = vmatmul.mubr.bf16.gmra.mxu0 %v525
          %v665 = vpop.f32.mrf.mxu0
          %v666 = vadd.f32 %v485, %v665
          %v667 = vpop.f32.mrf.mxu0
          %v668 = vpop.f32.mrf.mxu0
          %v669 = vadd.f32 %v485, %v668
          %v670 = vpop.f32.mrf.mxu0
          %671 = vmatprep.mubr.bf16.mxu0 0
          %672 = vmatmul.mubr.bf16.gmra.mxu0 %v526
          %v673 = vpop.f32.mrf.mxu0
          %v674 = vadd.f32 %v485, %v673
          %v675 = vpop.f32.mrf.mxu0
          %v676 = vpop.f32.mrf.mxu0
          %v677 = vadd.f32 %v485, %v676
          %v678 = vpop.f32.mrf.mxu0
          %679 = vdwg.mxu0
          %v680 = vld [vmem:[%s3] sm:$0x1]
          %v681 = vmul.f32 %v618, %v618
          %v682 = vmul.f32 %v621, %v621
          %v683 = vmul.f32 %v626, %v626
          %v684 = vmul.f32 %v629, %v629
          %v685 = vmul.f32 %v634, %v634
          %v686 = vmul.f32 %v637, %v637
          %v687 = vmul.f32 %v642, %v642
          %v688 = vmul.f32 %v645, %v645
          %v689 = vmul.f32 %v650, %v650
          %v690 = vmul.f32 %v653, %v653
          %v691 = vmul.f32 %v658, %v658
          %v692 = vmul.f32 %v661, %v661
          %v693 = vmul.f32 %v666, %v666
          %v694 = vmul.f32 %v669, %v669
          %v695 = vmul.f32 %v674, %v674
          %v696 = vmul.f32 %v677, %v677
          %697 = vadd.xlane.f32.xlu0 %v681
          %v698 = vpop.xlane.xlu0 %697
          %699 = vadd.xlane.f32.xlu0 %v682
          %v700 = vpop.xlane.xlu0 %699
          %701 = vadd.xlane.f32.xlu0 %v683
          %v702 = vpop.xlane.xlu0 %701
          %703 = vadd.xlane.f32.xlu0 %v684
          %v704 = vpop.xlane.xlu0 %703
          %705 = vadd.xlane.f32.xlu0 %v685
          %v706 = vpop.xlane.xlu0 %705
          %707 = vadd.xlane.f32.xlu0 %v686
          %v708 = vpop.xlane.xlu0 %707
          %709 = vadd.xlane.f32.xlu0 %v687
          %v710 = vpop.xlane.xlu0 %709
          %711 = vadd.xlane.f32.xlu0 %v688
          %v712 = vpop.xlane.xlu0 %711
          %713 = vadd.xlane.f32.xlu0 %v689
          %v714 = vpop.xlane.xlu0 %713
          %715 = vadd.xlane.f32.xlu0 %v690
          %v716 = vpop.xlane.xlu0 %715
          %717 = vadd.xlane.f32.xlu0 %v691
          %v718 = vpop.xlane.xlu0 %717
          %719 = vadd.xlane.f32.xlu0 %v692
          %v720 = vpop.xlane.xlu0 %719
          %721 = vadd.xlane.f32.xlu0 %v693
          %v722 = vpop.xlane.xlu0 %721
          %723 = vadd.xlane.f32.xlu0 %v694
          %v724 = vpop.xlane.xlu0 %723
          %725 = vadd.xlane.f32.xlu0 %v695
          %v726 = vpop.xlane.xlu0 %725
          %727 = vadd.xlane.f32.xlu0 %v696
          %v728 = vpop.xlane.xlu0 %727
          %v729 = vmul.f32 %v698, 0.03125
          %v730 = vmul.f32 %v700, 0.03125
          %v731 = vmul.f32 %v702, 0.03125
          %v732 = vmul.f32 %v704, 0.03125
          %v733 = vmul.f32 %v706, 0.03125
          %v734 = vmul.f32 %v708, 0.03125
          %v735 = vmul.f32 %v710, 0.03125
          %v736 = vmul.f32 %v712, 0.03125
          %v737 = vmul.f32 %v714, 0.03125
          %v738 = vmul.f32 %v716, 0.03125
          %v739 = vmul.f32 %v718, 0.03125
          %v740 = vmul.f32 %v720, 0.03125
          %v741 = vmul.f32 %v722, 0.03125
          %v742 = vmul.f32 %v724, 0.03125
          %v743 = vmul.f32 %v726, 0.03125
          %v744 = vmul.f32 %v728, 0.03125
          %v745 = vadd.f32 %v729, 1.1920929e-07
          %v746 = vadd.f32 %v730, 1.1920929e-07
          %v747 = vadd.f32 %v731, 1.1920929e-07
          %v748 = vadd.f32 %v732, 1.1920929e-07
          %v749 = vadd.f32 %v733, 1.1920929e-07
          %v750 = vadd.f32 %v734, 1.1920929e-07
          %v751 = vadd.f32 %v735, 1.1920929e-07
          %v752 = vadd.f32 %v736, 1.1920929e-07
          %v753 = vadd.f32 %v737, 1.1920929e-07
          %v754 = vadd.f32 %v738, 1.1920929e-07
          %v755 = vadd.f32 %v739, 1.1920929e-07
          %v756 = vadd.f32 %v740, 1.1920929e-07
          %v757 = vadd.f32 %v741, 1.1920929e-07
          %v758 = vadd.f32 %v742, 1.1920929e-07
          %v759 = vadd.f32 %v743, 1.1920929e-07
          %v760 = vadd.f32 %v744, 1.1920929e-07
          %v761 = vrsqrt.pop %v745
          %v762 = vrsqrt.pop %v746
          %v763 = vrsqrt.pop %v747
          %v764 = vrsqrt.pop %v748
          %v765 = vrsqrt.pop %v749
          %v766 = vrsqrt.pop %v750
          %v767 = vrsqrt.pop %v751
          %v768 = vrsqrt.pop %v752
          %v769 = vrsqrt.pop %v753
          %v770 = vrsqrt.pop %v754
          %v771 = vrsqrt.pop %v755
          %v772 = vrsqrt.pop %v756
          %v773 = vrsqrt.pop %v757
          %v774 = vrsqrt.pop %v758
          %v775 = vrsqrt.pop %v759
          %v776 = vrsqrt.pop %v760
          %v777 = vmul.f32 %v618, %v761
          %v778 = vmul.f32 %v621, %v762
          %v779 = vmul.f32 %v626, %v763
          %v780 = vmul.f32 %v629, %v764
          %v781 = vmul.f32 %v634, %v765
          %v782 = vmul.f32 %v637, %v766
          %v783 = vmul.f32 %v642, %v767
          %v784 = vmul.f32 %v645, %v768
          %v785 = vmul.f32 %v650, %v769
          %v786 = vmul.f32 %v653, %v770
          %v787 = vmul.f32 %v658, %v771
          %v788 = vmul.f32 %v661, %v772
          %v789 = vmul.f32 %v666, %v773
          %v790 = vmul.f32 %v669, %v774
          %v791 = vmul.f32 %v674, %v775
          %v792 = vmul.f32 %v677, %v776
          %v794 = vlaneseq
          %v795 = vshrl.u32 %v794, 7
          %v796 = vsub.s32 0, %v795
          %v797 = vrot.slane %v680, %v796
          %v799 = vmul.f32 %v777, %v797
          %v800 = vmul.f32 %v778, %v797
          %v801 = vmul.f32 %v779, %v797
          %v802 = vmul.f32 %v780, %v797
          %v803 = vmul.f32 %v781, %v797
          %v804 = vmul.f32 %v782, %v797
          %v805 = vmul.f32 %v783, %v797
          %v806 = vmul.f32 %v784, %v797
          %v807 = vmul.f32 %v785, %v797
          %v808 = vmul.f32 %v786, %v797
          %v809 = vmul.f32 %v787, %v797
          %v810 = vmul.f32 %v788, %v797
          %v811 = vmul.f32 %v789, %v797
          %v812 = vmul.f32 %v790, %v797
          %v813 = vmul.f32 %v791, %v797
          %v814 = vmul.f32 %v792, %v797
          %v815 = vmul.f32 %v799, 0.5
          %v816 = vmul.f32 %v800, 0.5
          %v817 = vmul.f32 %v801, 0.5
          %v818 = vmul.f32 %v802, 0.5
          %v819 = vmul.f32 %v803, 0.5
          %v820 = vmul.f32 %v804, 0.5
          %v821 = vmul.f32 %v805, 0.5
          %v822 = vmul.f32 %v806, 0.5
          %v823 = vmul.f32 %v807, 0.5
          %v824 = vmul.f32 %v808, 0.5
          %v825 = vmul.f32 %v809, 0.5
          %v826 = vmul.f32 %v810, 0.5
          %v827 = vmul.f32 %v811, 0.5
          %v828 = vmul.f32 %v812, 0.5
          %v829 = vmul.f32 %v813, 0.5
          %v830 = vmul.f32 %v814, 0.5
          %v831 = vmul.f32 %v799, 0.70710677
          %v832 = vmul.f32 %v800, 0.70710677
          %v833 = vmul.f32 %v801, 0.70710677
          %v834 = vmul.f32 %v802, 0.70710677
          %v835 = vmul.f32 %v803, 0.70710677
          %v836 = vmul.f32 %v804, 0.70710677
          %v837 = vmul.f32 %v805, 0.70710677
          %v838 = vmul.f32 %v806, 0.70710677
          %v839 = vmul.f32 %v807, 0.70710677
          %v840 = vmul.f32 %v808, 0.70710677
          %v841 = vmul.f32 %v809, 0.70710677
          %v842 = vmul.f32 %v810, 0.70710677
          %v843 = vmul.f32 %v811, 0.70710677
          %v844 = vmul.f32 %v812, 0.70710677
          %v845 = vmul.f32 %v813, 0.70710677
          %v846 = vmul.f32 %v814, 0.70710677
          %v847 = verf.f32.pop %v831
          %v848 = verf.f32.pop %v832
          %v849 = verf.f32.pop %v833
          %v850 = verf.f32.pop %v834
          %v851 = verf.f32.pop %v835
          %v852 = verf.f32.pop %v836
          %v853 = verf.f32.pop %v837
          %v854 = verf.f32.pop %v838
          %v855 = verf.f32.pop %v839
          %v856 = verf.f32.pop %v840
          %v857 = verf.f32.pop %v841
          %v858 = verf.f32.pop %v842
          %v859 = verf.f32.pop %v843
          %v860 = verf.f32.pop %v844
          %v861 = verf.f32.pop %v845
          %v862 = verf.f32.pop %v846
          %v863 = vadd.f32 %v847, 1.0
          %v864 = vadd.f32 %v848, 1.0
          %v865 = vadd.f32 %v849, 1.0
          %v866 = vadd.f32 %v850, 1.0
          %v867 = vadd.f32 %v851, 1.0
          %v868 = vadd.f32 %v852, 1.0
          %v869 = vadd.f32 %v853, 1.0
          %v870 = vadd.f32 %v854, 1.0
          %v871 = vadd.f32 %v855, 1.0
          %v872 = vadd.f32 %v856, 1.0
          %v873 = vadd.f32 %v857, 1.0
          %v874 = vadd.f32 %v858, 1.0
          %v875 = vadd.f32 %v859, 1.0
          %v876 = vadd.f32 %v860, 1.0
          %v877 = vadd.f32 %v861, 1.0
          %v878 = vadd.f32 %v862, 1.0
          %v879 = vmul.f32 %v815, %v863
          %v880 = vmul.f32 %v816, %v864
          %v881 = vmul.f32 %v817, %v865
          %v882 = vmul.f32 %v818, %v866
          %v883 = vmul.f32 %v819, %v867
          %v884 = vmul.f32 %v820, %v868
          %v885 = vmul.f32 %v821, %v869
          %v886 = vmul.f32 %v822, %v870
          %v887 = vmul.f32 %v823, %v871
          %v888 = vmul.f32 %v824, %v872
          %v889 = vmul.f32 %v825, %v873
          %v890 = vmul.f32 %v826, %v874
          %v891 = vmul.f32 %v827, %v875
          %v892 = vmul.f32 %v828, %v876
          %v893 = vmul.f32 %v829, %v877
          %v894 = vmul.f32 %v830, %v878
          %v895 = vpack.c.bf16 %v880, %v879
          %v896 = vpack.c.bf16 %v882, %v881
          %v897 = vpack.c.bf16 %v884, %v883
          %v898 = vpack.c.bf16 %v886, %v885
          %v899 = vpack.c.bf16 %v888, %v887
          %v900 = vpack.c.bf16 %v890, %v889
          %v901 = vpack.c.bf16 %v892, %v891
          %v902 = vpack.c.bf16 %v894, %v893
          %v911 = vunpack.c.l.b16 %v895
          %v912 = vunpack.c.h.b16 %v895
          %v913 = vunpack.c.l.b16 %v896
          %v914 = vunpack.c.h.b16 %v896
          %v915 = vunpack.c.l.b16 %v897
          %v916 = vunpack.c.h.b16 %v897
          %v917 = vunpack.c.l.b16 %v898
          %v918 = vunpack.c.h.b16 %v898
          %v919 = vunpack.c.l.b16 %v899
          %v920 = vunpack.c.h.b16 %v899
          %v921 = vunpack.c.l.b16 %v900
          %v922 = vunpack.c.h.b16 %v900
          %v923 = vunpack.c.l.b16 %v901
          %v924 = vunpack.c.h.b16 %v901
          %v925 = vunpack.c.l.b16 %v902
          %v926 = vunpack.c.h.b16 %v902
          %v927 = vpack.c.b16 %v911, %v911
          %v928 = vpack.c.b16 %v912, %v912
          %v929 = vpack.c.b16 %v913, %v913
          %v930 = vpack.c.b16 %v914, %v914
          %v931 = vpack.c.b16 %v915, %v915
          %v932 = vpack.c.b16 %v916, %v916
          %v933 = vpack.c.b16 %v917, %v917
          %v934 = vpack.c.b16 %v918, %v918
          %v935 = vpack.c.b16 %v919, %v919
          %v936 = vpack.c.b16 %v920, %v920
          %v937 = vpack.c.b16 %v921, %v921
          %v938 = vpack.c.b16 %v922, %v922
          %v939 = vpack.c.b16 %v923, %v923
          %v940 = vpack.c.b16 %v924, %v924
          %v941 = vpack.c.b16 %v925, %v925
          %v942 = vpack.c.b16 %v926, %v926
          %959 = vst [vmem:[#allocation2] sm:$0xf] %v927
          %960 = vst [vmem:[#allocation2 + $0x4] sm:$0xf] %v928
          %961 = vst [vmem:[#allocation2 + $0x8] sm:$0xf] %v929
          %962 = vst [vmem:[#allocation2 + $0xc] sm:$0xf] %v930
          %963 = vst [vmem:[#allocation2 + $0x10] sm:$0xf] %v931
          %964 = vst [vmem:[#allocation2 + $0x14] sm:$0xf] %v932
          %965 = vst [vmem:[#allocation2 + $0x18] sm:$0xf] %v933
          %966 = vst [vmem:[#allocation2 + $0x1c] sm:$0xf] %v934
          %967 = vst [vmem:[#allocation2 + $0x20] sm:$0xf] %v935
          %968 = vst [vmem:[#allocation2 + $0x24] sm:$0xf] %v936
          %969 = vst [vmem:[#allocation2 + $0x28] sm:$0xf] %v937
          %970 = vst [vmem:[#allocation2 + $0x2c] sm:$0xf] %v938
          %971 = vst [vmem:[#allocation2 + $0x30] sm:$0xf] %v939
          %972 = vst [vmem:[#allocation2 + $0x34] sm:$0xf] %v940
          %973 = vst [vmem:[#allocation2 + $0x38] sm:$0xf] %v941
          %974 = vst [vmem:[#allocation2 + $0x3c] sm:$0xf] %v942
          %975 = vst [vmem:[#allocation3] sm:$0xff] %v879
          %976 = vst [vmem:[#allocation3 + $0x8] sm:$0xff] %v880
          %977 = vst [vmem:[#allocation3 + $0x10] sm:$0xff] %v881
          %978 = vst [vmem:[#allocation3 + $0x18] sm:$0xff] %v882
          %979 = vst [vmem:[#allocation3 + $0x20] sm:$0xff] %v883
          %980 = vst [vmem:[#allocation3 + $0x28] sm:$0xff] %v884
          %981 = vst [vmem:[#allocation3 + $0x30] sm:$0xff] %v885
          %982 = vst [vmem:[#allocation3 + $0x38] sm:$0xff] %v886
          %983 = vst [vmem:[#allocation3 + $0x40] sm:$0xff] %v887
          %984 = vst [vmem:[#allocation3 + $0x48] sm:$0xff] %v888
          %985 = vst [vmem:[#allocation3 + $0x50] sm:$0xff] %v889
          %986 = vst [vmem:[#allocation3 + $0x58] sm:$0xff] %v890
          %987 = vst [vmem:[#allocation3 + $0x60] sm:$0xff] %v891
          %988 = vst [vmem:[#allocation3 + $0x68] sm:$0xff] %v892
          %989 = vst [vmem:[#allocation3 + $0x70] sm:$0xff] %v893
          %990 = vst [vmem:[#allocation3 + $0x78] sm:$0xff] %v894
        $region68: #{_mlp_forward_padded.1} parent=55 // pred_fallthru
          _
        %v991 = vld [vmem:[#allocation2] sm:$0xf]
        %v992 = vld [vmem:[#allocation2 + $0x4] sm:$0xf]
        %v993 = vld [vmem:[#allocation2 + $0x8] sm:$0xf]
        %v994 = vld [vmem:[#allocation2 + $0xc] sm:$0xf]
        %v995 = vld [vmem:[#allocation2 + $0x10] sm:$0xf]
        %v996 = vld [vmem:[#allocation2 + $0x14] sm:$0xf]
        %v997 = vld [vmem:[#allocation2 + $0x18] sm:$0xf]
        %v998 = vld [vmem:[#allocation2 + $0x1c] sm:$0xf]
        %v999 = vld [vmem:[#allocation2 + $0x20] sm:$0xf]
        %v1000 = vld [vmem:[#allocation2 + $0x24] sm:$0xf]
        %v1001 = vld [vmem:[#allocation2 + $0x28] sm:$0xf]
        %v1002 = vld [vmem:[#allocation2 + $0x2c] sm:$0xf]
        %v1003 = vld [vmem:[#allocation2 + $0x30] sm:$0xf]
        %v1004 = vld [vmem:[#allocation2 + $0x34] sm:$0xf]
        %v1005 = vld [vmem:[#allocation2 + $0x38] sm:$0xf]
        %v1006 = vld [vmem:[#allocation2 + $0x3c] sm:$0xf]
        %v1007 = vld [vmem:[%s373] sm:$0xf]
        %v1008 = vld [vmem:[%s373 + $0x4] sm:$0xf]
        %v1009 = vld [vmem:[%s373 + $0x8] sm:$0xf]
        %v1010 = vld [vmem:[%s373 + $0xc] sm:$0xf]
        %v1011 = vld [vmem:[%s373 + $0x10] sm:$0xf]
        %v1012 = vld [vmem:[%s373 + $0x14] sm:$0xf]
        %v1013 = vld [vmem:[%s373 + $0x18] sm:$0xf]
        %v1014 = vld [vmem:[%s373 + $0x1c] sm:$0xf]
        %v1015 = vld [vmem:[%s373 + $0x20] sm:$0xf]
        %v1016 = vld [vmem:[%s373 + $0x24] sm:$0xf]
        %v1017 = vld [vmem:[%s373 + $0x28] sm:$0xf]
        %v1018 = vld [vmem:[%s373 + $0x2c] sm:$0xf]
        %v1019 = vld [vmem:[%s373 + $0x30] sm:$0xf]
        %v1020 = vld [vmem:[%s373 + $0x34] sm:$0xf]
        %v1021 = vld [vmem:[%s373 + $0x38] sm:$0xf]
        %v1022 = vld [vmem:[%s373 + $0x3c] sm:$0xf]
        %v1023 = vld [vmem:[%s431] sm:$0x1]
        %v1025 = vlaneseq
        %v1026 = vshrl.u32 %v1025, 7
        %v1027 = vsub.s32 0, %v1026
        %v1028 = vrot.slane %v1023, %v1027
        %v1046 = vunpack.c.l.b16 %v991
        %v1047 = vunpack.c.l.b16 %v992
        %v1048 = vunpack.c.l.b16 %v993
        %v1049 = vunpack.c.l.b16 %v994
        %v1050 = vunpack.c.l.b16 %v995
        %v1051 = vunpack.c.l.b16 %v996
        %v1052 = vunpack.c.l.b16 %v997
        %v1053 = vunpack.c.l.b16 %v998
        %v1054 = vunpack.c.l.b16 %v999
        %v1055 = vunpack.c.l.b16 %v1000
        %v1056 = vunpack.c.l.b16 %v1001
        %v1057 = vunpack.c.l.b16 %v1002
        %v1058 = vunpack.c.l.b16 %v1003
        %v1059 = vunpack.c.l.b16 %v1004
        %v1060 = vunpack.c.l.b16 %v1005
        %v1061 = vunpack.c.l.b16 %v1006
        %v1062 = vpack.c.b16 %v1047, %v1046
        %v1063 = vpack.c.b16 %v1049, %v1048
        %v1064 = vpack.c.b16 %v1051, %v1050
        %v1065 = vpack.c.b16 %v1053, %v1052
        %v1066 = vpack.c.b16 %v1055, %v1054
        %v1067 = vpack.c.b16 %v1057, %v1056
        %v1068 = vpack.c.b16 %v1059, %v1058
        %v1069 = vpack.c.b16 %v1061, %v1060
        %v1094 = vunpack.c.l.b16 %v1007
        %v1095 = vunpack.c.l.b16 %v1008
        %v1096 = vunpack.c.l.b16 %v1009
        %v1097 = vunpack.c.l.b16 %v1010
        %v1098 = vunpack.c.l.b16 %v1011
        %v1099 = vunpack.c.l.b16 %v1012
        %v1100 = vunpack.c.l.b16 %v1013
        %v1101 = vunpack.c.l.b16 %v1014
        %v1102 = vunpack.c.l.b16 %v1015
        %v1103 = vunpack.c.l.b16 %v1016
        %v1104 = vunpack.c.l.b16 %v1017
        %v1105 = vunpack.c.l.b16 %v1018
        %v1106 = vunpack.c.l.b16 %v1019
        %v1107 = vunpack.c.l.b16 %v1020
        %v1108 = vunpack.c.l.b16 %v1021
        %v1109 = vunpack.c.l.b16 %v1022
        %v1110 = vpack.c.b16 %v1095, %v1094
        %v1111 = vpack.c.b16 %v1097, %v1096
        %v1112 = vpack.c.b16 %v1099, %v1098
        %v1113 = vpack.c.b16 %v1101, %v1100
        %v1114 = vpack.c.b16 %v1103, %v1102
        %v1115 = vpack.c.b16 %v1105, %v1104
        %v1116 = vpack.c.b16 %v1107, %v1106
        %v1117 = vpack.c.b16 %v1109, %v1108
        %1126 = vmatprep.subr.bf16.mxu0 0
        %1127 = vmatpush1.bf16.msra.mxu0 %v1117
        %1128 = vmatprep.subr.bf16.mxu0 0
        %1129 = vmatpush1.bf16.msra.mxu0 %v1116
        %1130 = vmatprep.subr.bf16.mxu0 0
        %1131 = vmatpush1.bf16.msra.mxu0 %v1115
        %1132 = vmatprep.subr.bf16.mxu0 0
        %1133 = vmatpush1.bf16.msra.mxu0 %v1114
        %1134 = vmatprep.subr.bf16.mxu0 0
        %1135 = vmatpush1.bf16.msra.mxu0 %v1113
        %1136 = vmatprep.subr.bf16.mxu0 0
        %1137 = vmatpush1.bf16.msra.mxu0 %v1112
        %1138 = vmatprep.subr.bf16.mxu0 0
        %1139 = vmatpush1.bf16.msra.mxu0 %v1111
        %1140 = vmatprep.subr.bf16.mxu0 0
        %1141 = vmatpush1.bf16.msra.mxu0 %v1110
        %1142 = vmatprep.subr.bf16.mxu0 0
        %1143 = vmatpush2.bf16.msra.mxu0 0
        %1144 = vmatprep.subr.bf16.mxu0 0
        %1145 = vmatpush2.bf16.msra.mxu0 0
        %1146 = vmatprep.subr.bf16.mxu0 0
        %1147 = vmatpush2.bf16.msra.mxu0 0
        %1148 = vmatprep.subr.bf16.mxu0 0
        %1149 = vmatpush2.bf16.msra.mxu0 0
        %1150 = vmatprep.subr.bf16.mxu0 0
        %1151 = vmatpush2.bf16.msra.mxu0 0
        %1152 = vmatprep.subr.bf16.mxu0 0
        %1153 = vmatpush2.bf16.msra.mxu0 0
        %1154 = vmatprep.subr.bf16.mxu0 0
        %1155 = vmatpush2.bf16.msra.mxu0 0
        %1156 = vmatprep.subr.bf16.mxu0 0
        %1157 = vmatpush2.bf16.msra.mxu0 0
        %1158 = vmatprep.mubr.bf16.mxu0 0
        %1159 = vmatmul.mubr.bf16.gmra.mxu0 %v1062
        %v1160 = vpop.f32.mrf.mxu0
        %v1161 = vadd.f32 %v1028, %v1160
        %v1162 = vpop.f32.mrf.mxu0
        %v1163 = vpop.f32.mrf.mxu0
        %v1164 = vadd.f32 %v1028, %v1163
        %v1165 = vpop.f32.mrf.mxu0
        %1166 = vmatprep.mubr.bf16.mxu0 0
        %1167 = vmatmul.mubr.bf16.gmra.mxu0 %v1063
        %v1168 = vpop.f32.mrf.mxu0
        %v1169 = vadd.f32 %v1028, %v1168
        %v1170 = vpop.f32.mrf.mxu0
        %v1171 = vpop.f32.mrf.mxu0
        %v1172 = vadd.f32 %v1028, %v1171
        %v1173 = vpop.f32.mrf.mxu0
        %1174 = vmatprep.mubr.bf16.mxu0 0
        %1175 = vmatmul.mubr.bf16.gmra.mxu0 %v1064
        %v1176 = vpop.f32.mrf.mxu0
        %v1177 = vadd.f32 %v1028, %v1176
        %v1178 = vpop.f32.mrf.mxu0
        %v1179 = vpop.f32.mrf.mxu0
        %v1180 = vadd.f32 %v1028, %v1179
        %v1181 = vpop.f32.mrf.mxu0
        %1182 = vmatprep.mubr.bf16.mxu0 0
        %1183 = vmatmul.mubr.bf16.gmra.mxu0 %v1065
        %v1184 = vpop.f32.mrf.mxu0
        %v1185 = vadd.f32 %v1028, %v1184
        %v1186 = vpop.f32.mrf.mxu0
        %v1187 = vpop.f32.mrf.mxu0
        %v1188 = vadd.f32 %v1028, %v1187
        %v1189 = vpop.f32.mrf.mxu0
        %1190 = vmatprep.mubr.bf16.mxu0 0
        %1191 = vmatmul.mubr.bf16.gmra.mxu0 %v1066
        %v1192 = vpop.f32.mrf.mxu0
        %v1193 = vadd.f32 %v1028, %v1192
        %v1194 = vpop.f32.mrf.mxu0
        %v1195 = vpop.f32.mrf.mxu0
        %v1196 = vadd.f32 %v1028, %v1195
        %v1197 = vpop.f32.mrf.mxu0
        %1198 = vmatprep.mubr.bf16.mxu0 0
        %1199 = vmatmul.mubr.bf16.gmra.mxu0 %v1067
        %v1200 = vpop.f32.mrf.mxu0
        %v1201 = vadd.f32 %v1028, %v1200
        %v1202 = vpop.f32.mrf.mxu0
        %v1203 = vpop.f32.mrf.mxu0
        %v1204 = vadd.f32 %v1028, %v1203
        %v1205 = vpop.f32.mrf.mxu0
        %1206 = vmatprep.mubr.bf16.mxu0 0
        %1207 = vmatmul.mubr.bf16.gmra.mxu0 %v1068
        %v1208 = vpop.f32.mrf.mxu0
        %v1209 = vadd.f32 %v1028, %v1208
        %v1210 = vpop.f32.mrf.mxu0
        %v1211 = vpop.f32.mrf.mxu0
        %v1212 = vadd.f32 %v1028, %v1211
        %v1213 = vpop.f32.mrf.mxu0
        %1214 = vmatprep.mubr.bf16.mxu0 0
        %1215 = vmatmul.mubr.bf16.gmra.mxu0 %v1069
        %v1216 = vpop.f32.mrf.mxu0
        %v1217 = vadd.f32 %v1028, %v1216
        %v1218 = vpop.f32.mrf.mxu0
        %v1219 = vpop.f32.mrf.mxu0
        %v1220 = vadd.f32 %v1028, %v1219
        %v1221 = vpop.f32.mrf.mxu0
        %1222 = vdwg.mxu0
        %v1223 = vld [vmem:[%s434] sm:$0x1]
        %v1224 = vmul.f32 %v1161, %v1161
        %v1225 = vmul.f32 %v1164, %v1164
        %v1226 = vmul.f32 %v1169, %v1169
        %v1227 = vmul.f32 %v1172, %v1172
        %v1228 = vmul.f32 %v1177, %v1177
        %v1229 = vmul.f32 %v1180, %v1180
        %v1230 = vmul.f32 %v1185, %v1185
        %v1231 = vmul.f32 %v1188, %v1188
        %v1232 = vmul.f32 %v1193, %v1193
        %v1233 = vmul.f32 %v1196, %v1196
        %v1234 = vmul.f32 %v1201, %v1201
        %v1235 = vmul.f32 %v1204, %v1204
        %v1236 = vmul.f32 %v1209, %v1209
        %v1237 = vmul.f32 %v1212, %v1212
        %v1238 = vmul.f32 %v1217, %v1217
        %v1239 = vmul.f32 %v1220, %v1220
        %1240 = vadd.xlane.f32.xlu0 %v1224
        %v1241 = vpop.xlane.xlu0 %1240
        %1242 = vadd.xlane.f32.xlu0 %v1225
        %v1243 = vpop.xlane.xlu0 %1242
        %1244 = vadd.xlane.f32.xlu0 %v1226
        %v1245 = vpop.xlane.xlu0 %1244
        %1246 = vadd.xlane.f32.xlu0 %v1227
        %v1247 = vpop.xlane.xlu0 %1246
        %1248 = vadd.xlane.f32.xlu0 %v1228
        %v1249 = vpop.xlane.xlu0 %1248
        %1250 = vadd.xlane.f32.xlu0 %v1229
        %v1251 = vpop.xlane.xlu0 %1250
        %1252 = vadd.xlane.f32.xlu0 %v1230
        %v1253 = vpop.xlane.xlu0 %1252
        %1254 = vadd.xlane.f32.xlu0 %v1231
        %v1255 = vpop.xlane.xlu0 %1254
        %1256 = vadd.xlane.f32.xlu0 %v1232
        %v1257 = vpop.xlane.xlu0 %1256
        %1258 = vadd.xlane.f32.xlu0 %v1233
        %v1259 = vpop.xlane.xlu0 %1258
        %1260 = vadd.xlane.f32.xlu0 %v1234
        %v1261 = vpop.xlane.xlu0 %1260
        %1262 = vadd.xlane.f32.xlu0 %v1235
        %v1263 = vpop.xlane.xlu0 %1262
        %1264 = vadd.xlane.f32.xlu0 %v1236
        %v1265 = vpop.xlane.xlu0 %1264
        %1266 = vadd.xlane.f32.xlu0 %v1237
        %v1267 = vpop.xlane.xlu0 %1266
        %1268 = vadd.xlane.f32.xlu0 %v1238
        %v1269 = vpop.xlane.xlu0 %1268
        %1270 = vadd.xlane.f32.xlu0 %v1239
        %v1271 = vpop.xlane.xlu0 %1270
        %v1272 = vmul.f32 %v1241, 0.03125
        %v1273 = vmul.f32 %v1243, 0.03125
        %v1274 = vmul.f32 %v1245, 0.03125
        %v1275 = vmul.f32 %v1247, 0.03125
        %v1276 = vmul.f32 %v1249, 0.03125
        %v1277 = vmul.f32 %v1251, 0.03125
        %v1278 = vmul.f32 %v1253, 0.03125
        %v1279 = vmul.f32 %v1255, 0.03125
        %v1280 = vmul.f32 %v1257, 0.03125
        %v1281 = vmul.f32 %v1259, 0.03125
        %v1282 = vmul.f32 %v1261, 0.03125
        %v1283 = vmul.f32 %v1263, 0.03125
        %v1284 = vmul.f32 %v1265, 0.03125
        %v1285 = vmul.f32 %v1267, 0.03125
        %v1286 = vmul.f32 %v1269, 0.03125
        %v1287 = vmul.f32 %v1271, 0.03125
        %v1288 = vadd.f32 %v1272, 1.1920929e-07
        %v1289 = vadd.f32 %v1273, 1.1920929e-07
        %v1290 = vadd.f32 %v1274, 1.1920929e-07
        %v1291 = vadd.f32 %v1275, 1.1920929e-07
        %v1292 = vadd.f32 %v1276, 1.1920929e-07
        %v1293 = vadd.f32 %v1277, 1.1920929e-07
        %v1294 = vadd.f32 %v1278, 1.1920929e-07
        %v1295 = vadd.f32 %v1279, 1.1920929e-07
        %v1296 = vadd.f32 %v1280, 1.1920929e-07
        %v1297 = vadd.f32 %v1281, 1.1920929e-07
        %v1298 = vadd.f32 %v1282, 1.1920929e-07
        %v1299 = vadd.f32 %v1283, 1.1920929e-07
        %v1300 = vadd.f32 %v1284, 1.1920929e-07
        %v1301 = vadd.f32 %v1285, 1.1920929e-07
        %v1302 = vadd.f32 %v1286, 1.1920929e-07
        %v1303 = vadd.f32 %v1287, 1.1920929e-07
        %v1304 = vrsqrt.pop %v1288
        %v1305 = vrsqrt.pop %v1289
        %v1306 = vrsqrt.pop %v1290
        %v1307 = vrsqrt.pop %v1291
        %v1308 = vrsqrt.pop %v1292
        %v1309 = vrsqrt.pop %v1293
        %v1310 = vrsqrt.pop %v1294
        %v1311 = vrsqrt.pop %v1295
        %v1312 = vrsqrt.pop %v1296
        %v1313 = vrsqrt.pop %v1297
        %v1314 = vrsqrt.pop %v1298
        %v1315 = vrsqrt.pop %v1299
        %v1316 = vrsqrt.pop %v1300
        %v1317 = vrsqrt.pop %v1301
        %v1318 = vrsqrt.pop %v1302
        %v1319 = vrsqrt.pop %v1303
        %v1320 = vmul.f32 %v1161, %v1304
        %v1321 = vmul.f32 %v1164, %v1305
        %v1322 = vmul.f32 %v1169, %v1306
        %v1323 = vmul.f32 %v1172, %v1307
        %v1324 = vmul.f32 %v1177, %v1308
        %v1325 = vmul.f32 %v1180, %v1309
        %v1326 = vmul.f32 %v1185, %v1310
        %v1327 = vmul.f32 %v1188, %v1311
        %v1328 = vmul.f32 %v1193, %v1312
        %v1329 = vmul.f32 %v1196, %v1313
        %v1330 = vmul.f32 %v1201, %v1314
        %v1331 = vmul.f32 %v1204, %v1315
        %v1332 = vmul.f32 %v1209, %v1316
        %v1333 = vmul.f32 %v1212, %v1317
        %v1334 = vmul.f32 %v1217, %v1318
        %v1335 = vmul.f32 %v1220, %v1319
        %v1337 = vlaneseq
        %v1338 = vshrl.u32 %v1337, 7
        %v1339 = vsub.s32 0, %v1338
        %v1340 = vrot.slane %v1223, %v1339
        %v1342 = vmul.f32 %v1320, %v1340
        %v1343 = vmul.f32 %v1321, %v1340
        %v1344 = vmul.f32 %v1322, %v1340
        %v1345 = vmul.f32 %v1323, %v1340
        %v1346 = vmul.f32 %v1324, %v1340
        %v1347 = vmul.f32 %v1325, %v1340
        %v1348 = vmul.f32 %v1326, %v1340
        %v1349 = vmul.f32 %v1327, %v1340
        %v1350 = vmul.f32 %v1328, %v1340
        %v1351 = vmul.f32 %v1329, %v1340
        %v1352 = vmul.f32 %v1330, %v1340
        %v1353 = vmul.f32 %v1331, %v1340
        %v1354 = vmul.f32 %v1332, %v1340
        %v1355 = vmul.f32 %v1333, %v1340
        %v1356 = vmul.f32 %v1334, %v1340
        %v1357 = vmul.f32 %v1335, %v1340
        %v1358 = vmul.f32 %v1342, 0.5
        %v1359 = vmul.f32 %v1343, 0.5
        %v1360 = vmul.f32 %v1344, 0.5
        %v1361 = vmul.f32 %v1345, 0.5
        %v1362 = vmul.f32 %v1346, 0.5
        %v1363 = vmul.f32 %v1347, 0.5
        %v1364 = vmul.f32 %v1348, 0.5
        %v1365 = vmul.f32 %v1349, 0.5
        %v1366 = vmul.f32 %v1350, 0.5
        %v1367 = vmul.f32 %v1351, 0.5
        %v1368 = vmul.f32 %v1352, 0.5
        %v1369 = vmul.f32 %v1353, 0.5
        %v1370 = vmul.f32 %v1354, 0.5
        %v1371 = vmul.f32 %v1355, 0.5
        %v1372 = vmul.f32 %v1356, 0.5
        %v1373 = vmul.f32 %v1357, 0.5
        %v1374 = vmul.f32 %v1342, 0.70710677
        %v1375 = vmul.f32 %v1343, 0.70710677
        %v1376 = vmul.f32 %v1344, 0.70710677
        %v1377 = vmul.f32 %v1345, 0.70710677
        %v1378 = vmul.f32 %v1346, 0.70710677
        %v1379 = vmul.f32 %v1347, 0.70710677
        %v1380 = vmul.f32 %v1348, 0.70710677
        %v1381 = vmul.f32 %v1349, 0.70710677
        %v1382 = vmul.f32 %v1350, 0.70710677
        %v1383 = vmul.f32 %v1351, 0.70710677
        %v1384 = vmul.f32 %v1352, 0.70710677
        %v1385 = vmul.f32 %v1353, 0.70710677
        %v1386 = vmul.f32 %v1354, 0.70710677
        %v1387 = vmul.f32 %v1355, 0.70710677
        %v1388 = vmul.f32 %v1356, 0.70710677
        %v1389 = vmul.f32 %v1357, 0.70710677
        %v1390 = verf.f32.pop %v1374
        %v1391 = verf.f32.pop %v1375
        %v1392 = verf.f32.pop %v1376
        %v1393 = verf.f32.pop %v1377
        %v1394 = verf.f32.pop %v1378
        %v1395 = verf.f32.pop %v1379
        %v1396 = verf.f32.pop %v1380
        %v1397 = verf.f32.pop %v1381
        %v1398 = verf.f32.pop %v1382
        %v1399 = verf.f32.pop %v1383
        %v1400 = verf.f32.pop %v1384
        %v1401 = verf.f32.pop %v1385
        %v1402 = verf.f32.pop %v1386
        %v1403 = verf.f32.pop %v1387
        %v1404 = verf.f32.pop %v1388
        %v1405 = verf.f32.pop %v1389
        %v1406 = vadd.f32 %v1390, 1.0
        %v1407 = vadd.f32 %v1391, 1.0
        %v1408 = vadd.f32 %v1392, 1.0
        %v1409 = vadd.f32 %v1393, 1.0
        %v1410 = vadd.f32 %v1394, 1.0
        %v1411 = vadd.f32 %v1395, 1.0
        %v1412 = vadd.f32 %v1396, 1.0
        %v1413 = vadd.f32 %v1397, 1.0
        %v1414 = vadd.f32 %v1398, 1.0
        %v1415 = vadd.f32 %v1399, 1.0
        %v1416 = vadd.f32 %v1400, 1.0
        %v1417 = vadd.f32 %v1401, 1.0
        %v1418 = vadd.f32 %v1402, 1.0
        %v1419 = vadd.f32 %v1403, 1.0
        %v1420 = vadd.f32 %v1404, 1.0
        %v1421 = vadd.f32 %v1405, 1.0
        %v1422 = vmul.f32 %v1358, %v1406
        %v1423 = vmul.f32 %v1359, %v1407
        %v1424 = vmul.f32 %v1360, %v1408
        %v1425 = vmul.f32 %v1361, %v1409
        %v1426 = vmul.f32 %v1362, %v1410
        %v1427 = vmul.f32 %v1363, %v1411
        %v1428 = vmul.f32 %v1364, %v1412
        %v1429 = vmul.f32 %v1365, %v1413
        %v1430 = vmul.f32 %v1366, %v1414
        %v1431 = vmul.f32 %v1367, %v1415
        %v1432 = vmul.f32 %v1368, %v1416
        %v1433 = vmul.f32 %v1369, %v1417
        %v1434 = vmul.f32 %v1370, %v1418
        %v1435 = vmul.f32 %v1371, %v1419
        %v1436 = vmul.f32 %v1372, %v1420
        %v1437 = vmul.f32 %v1373, %v1421
        %v1438 = vld [vmem:[#allocation3] sm:$0xff]
        %v1439 = vld [vmem:[#allocation3 + $0x8] sm:$0xff]
        %v1440 = vld [vmem:[#allocation3 + $0x10] sm:$0xff]
        %v1441 = vld [vmem:[#allocation3 + $0x18] sm:$0xff]
        %v1442 = vld [vmem:[#allocation3 + $0x20] sm:$0xff]
        %v1443 = vld [vmem:[#allocation3 + $0x28] sm:$0xff]
        %v1444 = vld [vmem:[#allocation3 + $0x30] sm:$0xff]
        %v1445 = vld [vmem:[#allocation3 + $0x38] sm:$0xff]
        %v1446 = vld [vmem:[#allocation3 + $0x40] sm:$0xff]
        %v1447 = vld [vmem:[#allocation3 + $0x48] sm:$0xff]
        %v1448 = vld [vmem:[#allocation3 + $0x50] sm:$0xff]
        %v1449 = vld [vmem:[#allocation3 + $0x58] sm:$0xff]
        %v1450 = vld [vmem:[#allocation3 + $0x60] sm:$0xff]
        %v1451 = vld [vmem:[#allocation3 + $0x68] sm:$0xff]
        %v1452 = vld [vmem:[#allocation3 + $0x70] sm:$0xff]
        %v1453 = vld [vmem:[#allocation3 + $0x78] sm:$0xff]
        %v1454 = vadd.f32 %v1438, %v1422
        %v1455 = vadd.f32 %v1439, %v1423
        %v1456 = vadd.f32 %v1440, %v1424
        %v1457 = vadd.f32 %v1441, %v1425
        %v1458 = vadd.f32 %v1442, %v1426
        %v1459 = vadd.f32 %v1443, %v1427
        %v1460 = vadd.f32 %v1444, %v1428
        %v1461 = vadd.f32 %v1445, %v1429
        %v1462 = vadd.f32 %v1446, %v1430
        %v1463 = vadd.f32 %v1447, %v1431
        %v1464 = vadd.f32 %v1448, %v1432
        %v1465 = vadd.f32 %v1449, %v1433
        %v1466 = vadd.f32 %v1450, %v1434
        %v1467 = vadd.f32 %v1451, %v1435
        %v1468 = vadd.f32 %v1452, %v1436
        %v1469 = vadd.f32 %v1453, %v1437
        %v1470 = vpack.c.bf16 %v1455, %v1454
        %v1471 = vpack.c.bf16 %v1457, %v1456
        %v1472 = vpack.c.bf16 %v1459, %v1458
        %v1473 = vpack.c.bf16 %v1461, %v1460
        %v1474 = vpack.c.bf16 %v1463, %v1462
        %v1475 = vpack.c.bf16 %v1465, %v1464
        %v1476 = vpack.c.bf16 %v1467, %v1466
        %v1477 = vpack.c.bf16 %v1469, %v1468
        %v1486 = vunpack.c.l.b16 %v1470
        %v1487 = vunpack.c.h.b16 %v1470
        %v1488 = vunpack.c.l.b16 %v1471
        %v1489 = vunpack.c.h.b16 %v1471
        %v1490 = vunpack.c.l.b16 %v1472
        %v1491 = vunpack.c.h.b16 %v1472
        %v1492 = vunpack.c.l.b16 %v1473
        %v1493 = vunpack.c.h.b16 %v1473
        %v1494 = vunpack.c.l.b16 %v1474
        %v1495 = vunpack.c.h.b16 %v1474
        %v1496 = vunpack.c.l.b16 %v1475
        %v1497 = vunpack.c.h.b16 %v1475
        %v1498 = vunpack.c.l.b16 %v1476
        %v1499 = vunpack.c.h.b16 %v1476
        %v1500 = vunpack.c.l.b16 %v1477
        %v1501 = vunpack.c.h.b16 %v1477
        %v1502 = vpack.c.b16 %v1486, %v1486
        %v1503 = vpack.c.b16 %v1487, %v1487
        %v1504 = vpack.c.b16 %v1488, %v1488
        %v1505 = vpack.c.b16 %v1489, %v1489
        %v1506 = vpack.c.b16 %v1490, %v1490
        %v1507 = vpack.c.b16 %v1491, %v1491
        %v1508 = vpack.c.b16 %v1492, %v1492
        %v1509 = vpack.c.b16 %v1493, %v1493
        %v1510 = vpack.c.b16 %v1494, %v1494
        %v1511 = vpack.c.b16 %v1495, %v1495
        %v1512 = vpack.c.b16 %v1496, %v1496
        %v1513 = vpack.c.b16 %v1497, %v1497
        %v1514 = vpack.c.b16 %v1498, %v1498
        %v1515 = vpack.c.b16 %v1499, %v1499
        %v1516 = vpack.c.b16 %v1500, %v1500
        %v1517 = vpack.c.b16 %v1501, %v1501
        %1534 = vst [vmem:[#allocation2] sm:$0xf] %v1502
        %1535 = vst [vmem:[#allocation2 + $0x4] sm:$0xf] %v1503
        %1536 = vst [vmem:[#allocation2 + $0x8] sm:$0xf] %v1504
        %1537 = vst [vmem:[#allocation2 + $0xc] sm:$0xf] %v1505
        %1538 = vst [vmem:[#allocation2 + $0x10] sm:$0xf] %v1506
        %1539 = vst [vmem:[#allocation2 + $0x14] sm:$0xf] %v1507
        %1540 = vst [vmem:[#allocation2 + $0x18] sm:$0xf] %v1508
        %1541 = vst [vmem:[#allocation2 + $0x1c] sm:$0xf] %v1509
        %1542 = vst [vmem:[#allocation2 + $0x20] sm:$0xf] %v1510
        %1543 = vst [vmem:[#allocation2 + $0x24] sm:$0xf] %v1511
        %1544 = vst [vmem:[#allocation2 + $0x28] sm:$0xf] %v1512
        %1545 = vst [vmem:[#allocation2 + $0x2c] sm:$0xf] %v1513
        %1546 = vst [vmem:[#allocation2 + $0x30] sm:$0xf] %v1514
        %1547 = vst [vmem:[#allocation2 + $0x34] sm:$0xf] %v1515
        %1548 = vst [vmem:[#allocation2 + $0x38] sm:$0xf] %v1516
        %1549 = vst [vmem:[#allocation2 + $0x3c] sm:$0xf] %v1517
        %p1550 = scmp.eq.s32.totalorder %s30, 1
        %p1551 = pnand %p1550, %p443
        %p1552 = pneg %p1551
        // Predicated region
        $region69: #{_mlp_forward_padded.1} parent=55 // pred_check
          _
        $region70: #{_mlp_forward_padded.1} parent=55 // pred_check_branch
          %1554 = sbr.rel (%p1551) target = $region72
        $region71: #{_mlp_forward_padded.1} parent=55 // pred_region
          %v1555 = vld [vmem:[#allocation2] sm:$0xf]
          %v1556 = vld [vmem:[#allocation2 + $0x4] sm:$0xf]
          %v1557 = vld [vmem:[#allocation2 + $0x8] sm:$0xf]
          %v1558 = vld [vmem:[#allocation2 + $0xc] sm:$0xf]
          %v1559 = vld [vmem:[#allocation2 + $0x10] sm:$0xf]
          %v1560 = vld [vmem:[#allocation2 + $0x14] sm:$0xf]
          %v1561 = vld [vmem:[#allocation2 + $0x18] sm:$0xf]
          %v1562 = vld [vmem:[#allocation2 + $0x1c] sm:$0xf]
          %v1563 = vld [vmem:[#allocation2 + $0x20] sm:$0xf]
          %v1564 = vld [vmem:[#allocation2 + $0x24] sm:$0xf]
          %v1565 = vld [vmem:[#allocation2 + $0x28] sm:$0xf]
          %v1566 = vld [vmem:[#allocation2 + $0x2c] sm:$0xf]
          %v1567 = vld [vmem:[#allocation2 + $0x30] sm:$0xf]
          %v1568 = vld [vmem:[#allocation2 + $0x34] sm:$0xf]
          %v1569 = vld [vmem:[#allocation2 + $0x38] sm:$0xf]
          %v1570 = vld [vmem:[#allocation2 + $0x3c] sm:$0xf]
          %v1571 = vld [vmem:[#allocation7] sm:$0xf]
          %v1572 = vld [vmem:[#allocation7 + $0x4] sm:$0xf]
          %v1573 = vld [vmem:[#allocation7 + $0x8] sm:$0xf]
          %v1574 = vld [vmem:[#allocation7 + $0xc] sm:$0xf]
          %v1575 = vld [vmem:[#allocation7 + $0x10] sm:$0xf]
          %v1576 = vld [vmem:[#allocation7 + $0x14] sm:$0xf]
          %v1577 = vld [vmem:[#allocation7 + $0x18] sm:$0xf]
          %v1578 = vld [vmem:[#allocation7 + $0x1c] sm:$0xf]
          %v1579 = vld [vmem:[#allocation7 + $0x20] sm:$0xf]
          %v1580 = vld [vmem:[#allocation7 + $0x24] sm:$0xf]
          %v1581 = vld [vmem:[#allocation7 + $0x28] sm:$0xf]
          %v1582 = vld [vmem:[#allocation7 + $0x2c] sm:$0xf]
          %v1583 = vld [vmem:[#allocation7 + $0x30] sm:$0xf]
          %v1584 = vld [vmem:[#allocation7 + $0x34] sm:$0xf]
          %v1585 = vld [vmem:[#allocation7 + $0x38] sm:$0xf]
          %v1586 = vld [vmem:[#allocation7 + $0x3c] sm:$0xf]
          %v1587 = vld [vmem:[%s8] sm:$0x1]
          %v1589 = vlaneseq
          %v1590 = vshrl.u32 %v1589, 7
          %v1591 = vsub.s32 0, %v1590
          %v1592 = vrot.slane %v1587, %v1591
          %v1610 = vunpack.c.l.b16 %v1555
          %v1611 = vunpack.c.l.b16 %v1556
          %v1612 = vunpack.c.l.b16 %v1557
          %v1613 = vunpack.c.l.b16 %v1558
          %v1614 = vunpack.c.l.b16 %v1559
          %v1615 = vunpack.c.l.b16 %v1560
          %v1616 = vunpack.c.l.b16 %v1561
          %v1617 = vunpack.c.l.b16 %v1562
          %v1618 = vunpack.c.l.b16 %v1563
          %v1619 = vunpack.c.l.b16 %v1564
          %v1620 = vunpack.c.l.b16 %v1565
          %v1621 = vunpack.c.l.b16 %v1566
          %v1622 = vunpack.c.l.b16 %v1567
          %v1623 = vunpack.c.l.b16 %v1568
          %v1624 = vunpack.c.l.b16 %v1569
          %v1625 = vunpack.c.l.b16 %v1570
          %v1626 = vpack.c.b16 %v1611, %v1610
          %v1627 = vpack.c.b16 %v1613, %v1612
          %v1628 = vpack.c.b16 %v1615, %v1614
          %v1629 = vpack.c.b16 %v1617, %v1616
          %v1630 = vpack.c.b16 %v1619, %v1618
          %v1631 = vpack.c.b16 %v1621, %v1620
          %v1632 = vpack.c.b16 %v1623, %v1622
          %v1633 = vpack.c.b16 %v1625, %v1624
          %v1658 = vunpack.c.l.b16 %v1571
          %v1659 = vunpack.c.l.b16 %v1572
          %v1660 = vunpack.c.l.b16 %v1573
          %v1661 = vunpack.c.l.b16 %v1574
          %v1662 = vunpack.c.l.b16 %v1575
          %v1663 = vunpack.c.l.b16 %v1576
          %v1664 = vunpack.c.l.b16 %v1577
          %v1665 = vunpack.c.l.b16 %v1578
          %v1666 = vunpack.c.l.b16 %v1579
          %v1667 = vunpack.c.l.b16 %v1580
          %v1668 = vunpack.c.l.b16 %v1581
          %v1669 = vunpack.c.l.b16 %v1582
          %v1670 = vunpack.c.l.b16 %v1583
          %v1671 = vunpack.c.l.b16 %v1584
          %v1672 = vunpack.c.l.b16 %v1585
          %v1673 = vunpack.c.l.b16 %v1586
          %v1674 = vpack.c.b16 %v1659, %v1658
          %v1675 = vpack.c.b16 %v1661, %v1660
          %v1676 = vpack.c.b16 %v1663, %v1662
          %v1677 = vpack.c.b16 %v1665, %v1664
          %v1678 = vpack.c.b16 %v1667, %v1666
          %v1679 = vpack.c.b16 %v1669, %v1668
          %v1680 = vpack.c.b16 %v1671, %v1670
          %v1681 = vpack.c.b16 %v1673, %v1672
          %1690 = vmatprep.subr.bf16.mxu0 0
          %1691 = vmatpush1.bf16.msra.mxu0 %v1681
          %1692 = vmatprep.subr.bf16.mxu0 0
          %1693 = vmatpush1.bf16.msra.mxu0 %v1680
          %1694 = vmatprep.subr.bf16.mxu0 0
          %1695 = vmatpush1.bf16.msra.mxu0 %v1679
          %1696 = vmatprep.subr.bf16.mxu0 0
          %1697 = vmatpush1.bf16.msra.mxu0 %v1678
          %1698 = vmatprep.subr.bf16.mxu0 0
          %1699 = vmatpush1.bf16.msra.mxu0 %v1677
          %1700 = vmatprep.subr.bf16.mxu0 0
          %1701 = vmatpush1.bf16.msra.mxu0 %v1676
          %1702 = vmatprep.subr.bf16.mxu0 0
          %1703 = vmatpush1.bf16.msra.mxu0 %v1675
          %1704 = vmatprep.subr.bf16.mxu0 0
          %1705 = vmatpush1.bf16.msra.mxu0 %v1674
          %1706 = vmatprep.subr.bf16.mxu0 0
          %1707 = vmatpush2.bf16.msra.mxu0 0
          %1708 = vmatprep.subr.bf16.mxu0 0
          %1709 = vmatpush2.bf16.msra.mxu0 0
          %1710 = vmatprep.subr.bf16.mxu0 0
          %1711 = vmatpush2.bf16.msra.mxu0 0
          %1712 = vmatprep.subr.bf16.mxu0 0
          %1713 = vmatpush2.bf16.msra.mxu0 0
          %1714 = vmatprep.subr.bf16.mxu0 0
          %1715 = vmatpush2.bf16.msra.mxu0 0
          %1716 = vmatprep.subr.bf16.mxu0 0
          %1717 = vmatpush2.bf16.msra.mxu0 0
          %1718 = vmatprep.subr.bf16.mxu0 0
          %1719 = vmatpush2.bf16.msra.mxu0 0
          %1720 = vmatprep.subr.bf16.mxu0 0
          %1721 = vmatpush2.bf16.msra.mxu0 0
          %1722 = vmatprep.mubr.bf16.mxu0 0
          %1723 = vmatmul.mubr.bf16.gmra.mxu0 %v1626
          %v1724 = vpop.f32.mrf.mxu0
          %v1725 = vadd.f32 %v1592, %v1724
          %v1726 = vpop.f32.mrf.mxu0
          %v1727 = vpop.f32.mrf.mxu0
          %v1728 = vadd.f32 %v1592, %v1727
          %v1729 = vpop.f32.mrf.mxu0
          %1730 = vmatprep.mubr.bf16.mxu0 0
          %1731 = vmatmul.mubr.bf16.gmra.mxu0 %v1627
          %v1732 = vpop.f32.mrf.mxu0
          %v1733 = vadd.f32 %v1592, %v1732
          %v1734 = vpop.f32.mrf.mxu0
          %v1735 = vpop.f32.mrf.mxu0
          %v1736 = vadd.f32 %v1592, %v1735
          %v1737 = vpop.f32.mrf.mxu0
          %1738 = vmatprep.mubr.bf16.mxu0 0
          %1739 = vmatmul.mubr.bf16.gmra.mxu0 %v1628
          %v1740 = vpop.f32.mrf.mxu0
          %v1741 = vadd.f32 %v1592, %v1740
          %v1742 = vpop.f32.mrf.mxu0
          %v1743 = vpop.f32.mrf.mxu0
          %v1744 = vadd.f32 %v1592, %v1743
          %v1745 = vpop.f32.mrf.mxu0
          %1746 = vmatprep.mubr.bf16.mxu0 0
          %1747 = vmatmul.mubr.bf16.gmra.mxu0 %v1629
          %v1748 = vpop.f32.mrf.mxu0
          %v1749 = vadd.f32 %v1592, %v1748
          %v1750 = vpop.f32.mrf.mxu0
          %v1751 = vpop.f32.mrf.mxu0
          %v1752 = vadd.f32 %v1592, %v1751
          %v1753 = vpop.f32.mrf.mxu0
          %1754 = vmatprep.mubr.bf16.mxu0 0
          %1755 = vmatmul.mubr.bf16.gmra.mxu0 %v1630
          %v1756 = vpop.f32.mrf.mxu0
          %v1757 = vadd.f32 %v1592, %v1756
          %v1758 = vpop.f32.mrf.mxu0
          %v1759 = vpop.f32.mrf.mxu0
          %v1760 = vadd.f32 %v1592, %v1759
          %v1761 = vpop.f32.mrf.mxu0
          %1762 = vmatprep.mubr.bf16.mxu0 0
          %1763 = vmatmul.mubr.bf16.gmra.mxu0 %v1631
          %v1764 = vpop.f32.mrf.mxu0
          %v1765 = vadd.f32 %v1592, %v1764
          %v1766 = vpop.f32.mrf.mxu0
          %v1767 = vpop.f32.mrf.mxu0
          %v1768 = vadd.f32 %v1592, %v1767
          %v1769 = vpop.f32.mrf.mxu0
          %1770 = vmatprep.mubr.bf16.mxu0 0
          %1771 = vmatmul.mubr.bf16.gmra.mxu0 %v1632
          %v1772 = vpop.f32.mrf.mxu0
          %v1773 = vadd.f32 %v1592, %v1772
          %v1774 = vpop.f32.mrf.mxu0
          %v1775 = vpop.f32.mrf.mxu0
          %v1776 = vadd.f32 %v1592, %v1775
          %v1777 = vpop.f32.mrf.mxu0
          %1778 = vmatprep.mubr.bf16.mxu0 0
          %1779 = vmatmul.mubr.bf16.gmra.mxu0 %v1633
          %v1780 = vpop.f32.mrf.mxu0
          %v1781 = vadd.f32 %v1592, %v1780
          %v1782 = vpop.f32.mrf.mxu0
          %v1783 = vpop.f32.mrf.mxu0
          %v1784 = vadd.f32 %v1592, %v1783
          %v1785 = vpop.f32.mrf.mxu0
          %1786 = vdwg.mxu0
          %1787 = vst [vmem:[%s439] sm:$0xff] %v1725
          %1788 = vst [vmem:[%s439 + $0x8] sm:$0xff] %v1728
          %1789 = vst [vmem:[%s439 + $0x10] sm:$0xff] %v1733
          %1790 = vst [vmem:[%s439 + $0x18] sm:$0xff] %v1736
          %1791 = vst [vmem:[%s439 + $0x20] sm:$0xff] %v1741
          %1792 = vst [vmem:[%s439 + $0x28] sm:$0xff] %v1744
          %1793 = vst [vmem:[%s439 + $0x30] sm:$0xff] %v1749
          %1794 = vst [vmem:[%s439 + $0x38] sm:$0xff] %v1752
          %1795 = vst [vmem:[%s439 + $0x40] sm:$0xff] %v1757
          %1796 = vst [vmem:[%s439 + $0x48] sm:$0xff] %v1760
          %1797 = vst [vmem:[%s439 + $0x50] sm:$0xff] %v1765
          %1798 = vst [vmem:[%s439 + $0x58] sm:$0xff] %v1768
          %1799 = vst [vmem:[%s439 + $0x60] sm:$0xff] %v1773
          %1800 = vst [vmem:[%s439 + $0x68] sm:$0xff] %v1776
          %1801 = vst [vmem:[%s439 + $0x70] sm:$0xff] %v1781
          %1802 = vst [vmem:[%s439 + $0x78] sm:$0xff] %v1784
        $region72: #{_mlp_forward_padded.1} parent=55 // pred_fallthru
          _
        %s1803 = smul.u32 16, %s29
        %p1804 = scmp.lt.s32.totalorder %s1803, 15
        %s1805 = scalar_select %p1804, %s1803, 15
        %s1806 = smul.addr %s1805, 8
        %s1807 = scalar_lea.vmem %s9, %s1806
        // Predicated region
        $region73: #{_mlp_forward_padded.1} parent=55 // pred_check
          %p1808 = pneg %p272
        $region74: #{_mlp_forward_padded.1} parent=55 // pred_check_branch
          %1810 = sbr.rel (%p1808) target = $region76
        $region75: #{_mlp_forward_padded.1} parent=55 // pred_region
          %s1811 = smul.u32 16, %s29
        $region76: #{_mlp_forward_padded.1} parent=55 // pred_fallthru
          _
        // Predicated region
        $region77: #{_mlp_forward_padded.1} parent=55 // pred_check
          %p1812 = pneg %p272
        $region78: #{_mlp_forward_padded.1} parent=55 // pred_check_branch
          %1814 = sbr.rel (%p1812) target = $region80
        $region79: #{_mlp_forward_padded.1} parent=55 // pred_region
          %s1815 = smul.u32 16, %s29
          %p1816 = scmp.lt.s32.totalorder %s1815, 15
          %s1817 = scalar_select %p1816, %s1815, 15
          %s1818 = smul.addr %s1817, 8
          %s1819 = scalar_lea.vmem %s9, %s1818
        $region80: #{_mlp_forward_padded.1} parent=55 // pred_fallthru
          _
      $region56: #{_mlp_forward_padded.1} parent=5 // pred_fallthru
        _
      %p1820 = scmp.le.s32.totalorder 2, %s19
      // Predicated region
      $region81: #{_mlp_forward_padded.1} parent=5 // pred_check
        %p1821 = pneg %p1820
      $region82: #{_mlp_forward_padded.1} parent=5 // pred_check_branch
        %1823 = sbr.rel (%p1821) target = $region84
      $region83: #{_mlp_forward_padded.1} parent=5 // pred_region
        %s1824 = ssub.s32 %s19, 2
      $region84: #{_mlp_forward_padded.1} parent=5 // pred_fallthru
        _
    $region6: #{_mlp_forward_padded.1} parent=1 // loop_footer
      %s23 = sadd.s32 1, %s19
    $region7: #{_mlp_forward_padded.1} parent=1 // loop_footer_branch
      %18 = sbr.rel target = $region3
    $region8: #{_mlp_forward_padded.1} parent=1 // loop_exit
      _
    %1825 = vsyncpa [#allocation6], 1
    %s1826 = scalar_lea.sflag [#allocation6], 1
    %1827 = vsyncpa %s1826, 1
    %1828 = vsyncpa [#allocation8], 1

</llo_original>
